<compile_context>
chip_gen: v7x
topology: tpu7x:2x2x1
jax: 0.10.0
libtpu: 0.0.40
codegen_flags: <defaults>
</compile_context>

<pallas_src>
import functools

import jax
import jax.numpy as jnp
import numpy as np
from jax import lax
from jax.experimental import pallas as pl
from jax.experimental.pallas import tpu as pltpu

# ----------------------------- configuration --------------------------------
B, S = 2, 8          # batch, sequence -> T = 16 tokens
D = 32               # args.decoder_embed_dim (routing_dim)
F = 64               # args.decoder_ffn_embed_dim
L = 2                # args.moe_sublayers
E = 1                # num_workers = data-parallel world size (single device)
EXPERT_ID = 0        # data-parallel rank
CAPACITY_FACTOR = 1.0
LN_EPS = 1e-5

_MIB = 1 << 20


def _round_up(x, m):
    return (x + m - 1) // m * m


# --------------------------- shared sublayer body ----------------------------
def _moe_sublayer(h, l, ln_g_ref, ln_b_ref, w1_ref, b1_ref, w2_ref, b2_ref, *,
                  inv_d, ln_eps, f_chunk, w_dtype):
    """One MoESublayer: h + ff2(relu(ff1(LayerNorm(h)))).

    INVARIANT (relied on for the LayerNorm statistics): padded lanes
    (columns >= d_real) of `h` are exactly zero, and every padded row/column
    of ln_g/ln_b/w1/b1/w2/b2 is exactly zero, so padded lanes stay zero
    through the sublayer.  prepare_expert_params() guarantees this.
    """
    g = ln_g_ref[l].astype(jnp.float32)        # [1, Dp]
    beta = ln_b_ref[l].astype(jnp.float32)     # [1, Dp]

    # LayerNorm stats over the REAL embed dim.  Padded lanes of h are zero, so
    # the plain lane-sums already equal the real-lane sums; E[x^2] - mu^2
    # avoids the per-element lane mask + select of the previous version.
    mu = jnp.sum(h, axis=-1, keepdims=True) * inv_d
    ms = jnp.sum(h * h, axis=-1, keepdims=True) * inv_d
    var = jnp.maximum(ms - mu * mu, 0.0)
    xn = ((h - mu) * lax.rsqrt(var + ln_eps) * g + beta).astype(w_dtype)
    # padded lanes of xn are 0 because padded g/beta are 0.

    f_pad = w1_ref.shape[-1]
    h2 = b2_ref[l].astype(jnp.float32)         # [1, Dp] -> broadcasts over rows
    # F-chunking: keep the [TM, f_chunk] relu intermediate small (vregs, not a
    # spilled [TM, F] f32 buffer) while accumulating ff2 in f32.
    for f0 in range(0, f_pad, f_chunk):
        f1 = min(f0 + f_chunk, f_pad)
        h1 = jnp.dot(xn, w1_ref[l, :, f0:f1],
                     preferred_element_type=jnp.float32)
        h1 = jnp.maximum(h1 + b1_ref[l, :, f0:f1].astype(jnp.float32), 0.0)
        h2 = h2 + jnp.dot(h1.astype(w_dtype), w2_ref[l, f0:f1, :],
                          preferred_element_type=jnp.float32)
    return h + h2


# -------------------- fused expert kernel: resident weights ------------------
def _expert_kernel_resident(x_ref, cent_ref, ln_g_ref, ln_b_ref, w1_ref,
                            b1_ref, w2_ref, b2_ref, out_ref, *, n_sublayers,
                            d_real, ln_eps, f_chunk):
    w_dtype = w1_ref.dtype
    inv_d = jnp.float32(1.0 / d_real)

    x = x_ref[...].astype(jnp.float32)             # [TM, Dp]
    cent = cent_ref[...].astype(jnp.float32)       # [1, Dp]
    # alpha gate: lane-wise multiply + cross-lane sum (VPU/XLU) instead of an
    # N=1 MXU matvec; sigmoid goes to the EUP slot.
    alpha = jax.nn.sigmoid(jnp.sum(x * cent, axis=-1, keepdims=True))

    h = x
    for l in range(n_sublayers):                   # static unroll, L is small
        h = _moe_sublayer(h, l, ln_g_ref, ln_b_ref, w1_ref, b1_ref, w2_ref,
                          b2_ref, inv_d=inv_d, ln_eps=ln_eps,
                          f_chunk=f_chunk, w_dtype=w_dtype)

    # Re-read x for the (1 - alpha) * x residual instead of keeping a second
    # f32 copy live across the whole sublayer loop (vreg pressure).
    x_res = x_ref[...].astype(jnp.float32)
    out_ref[...] = (alpha * h + (1.0 - alpha) * x_res).astype(out_ref.dtype)


# ----------------- fused expert kernel: streamed sublayer weights ------------
def _expert_kernel_stream(x_ref, cent_ref, ln_g_ref, ln_b_ref, w1_ref, b1_ref,
                          w2_ref, b2_ref, out_ref, h_acc, alpha_acc, *,
                          d_real, ln_eps, f_chunk):
    # grid = (token_tiles, L).  Only one sublayer's weights are in VMEM at a
    # time (double-buffered by Pallas so the next sublayer prefetches while
    # this one computes); h and alpha persist in VMEM scratch across L.
    w_dtype = w1_ref.dtype
    inv_d = jnp.float32(1.0 / d_real)
    l = pl.program_id(1)

    @pl.when(l == 0)
    def _():
        x = x_ref[...].astype(jnp.float32)
        cent = cent_ref[...].astype(jnp.float32)
        alpha_acc[...] = jax.nn.sigmoid(
            jnp.sum(x * cent, axis=-1, keepdims=True))
        h_acc[...] = x

    h_acc[...] = _moe_sublayer(h_acc[...], 0, ln_g_ref, ln_b_ref, w1_ref,
                               b1_ref, w2_ref, b2_ref, inv_d=inv_d,
                               ln_eps=ln_eps, f_chunk=f_chunk,
                               w_dtype=w_dtype)

    @pl.when(l == pl.num_programs(1) - 1)
    def _():
        alpha = alpha_acc[...]
        x_res = x_ref[...].astype(jnp.float32)
        out_ref[...] = (alpha * h_acc[...]
                        + (1.0 - alpha) * x_res).astype(out_ref.dtype)


# --------------------------- parameter preparation ---------------------------
def prepare_expert_params(centroids, params, expert_id,
                          *, compute_dtype=jnp.float32):
    """Pad to lane-dense (multiples of 128) shapes and cast matmul weights
    ONCE, instead of jnp.pad + astype on every forward call.

    All padded rows/cols are zero (jnp.pad default) -- required invariant for
    the in-kernel LayerNorm statistics (see _moe_sublayer docstring).
    """
    ln_g, ln_b, w1, b1, w2, b2 = params
    n_sub, d, f = w1.shape
    d_pad = _round_up(d, 128)
    f_pad = _round_up(f, 128)

    def pad3(a, rows, cols):
        return jnp.pad(a, ((0, 0), (0, rows - a.shape[1]),
                           (0, cols - a.shape[2])))

    cent_row = jnp.pad(centroids[expert_id:expert_id + 1],
                       ((0, 0), (0, d_pad - d)))
    return dict(
        d=d, f=f, d_pad=d_pad, f_pad=f_pad, n_sub=n_sub,
        compute_dtype=compute_dtype,
        cent_row=cent_row,                                    # f32, [1, Dp]
        ln_g=pad3(ln_g, 1, d_pad), ln_b=pad3(ln_b, 1, d_pad),  # f32
        w1=pad3(w1, d_pad, f_pad).astype(compute_dtype),
        b1=pad3(b1, 1, f_pad),                                # f32
        w2=pad3(w2, f_pad, d_pad).astype(compute_dtype),
        b2=pad3(b2, 1, d_pad),                                # f32
    )


# ------------------------------- expert forward -------------------------------
def expert_forward(routed, prepared, *, tm=256, f_chunk=512, mode="auto",
                   resident_budget_bytes=40 * _MIB):
    """alpha * expert_network(routed) + (1 - alpha) * routed."""
    t = routed.shape[0]
    if t == 0:
        return routed
    d, d_pad, f_pad = prepared["d"], prepared["d_pad"], prepared["f_pad"]
    n_sub = prepared["n_sub"]
    cdtype = prepared["compute_dtype"]

    # Token tiling: multiple of 8 rows, lane-dense Dp columns.
    tm = max(8, min(_round_up(tm, 8), _round_up(t, 8)))
    t_pad = _round_up(t, tm)
    # v7x has 2 TensorCores: keep >= 2 token tiles where possible so the
    # "parallel" axis can be sharded across them.
    if t_pad // tm < 2 and tm > 8:
        tm = max(8, _round_up(tm // 2, 8))
        t_pad = _round_up(t, tm)
    f_chunk = min(_round_up(f_chunk, 128), f_pad)

    x_p = jnp.pad(routed, ((0, t_pad - t), (0, d_pad - d)))

    # ---- VMEM budget accounting (drives mode selection + vmem_limit_bytes) --
    wbytes = jnp.dtype(cdtype).itemsize
    weight_bytes = n_sub * 2 * d_pad * f_pad * wbytes            # w1 + w2
    small_bytes = (n_sub * (3 * d_pad + f_pad) + d_pad) * 4      # LN/biases/cent
    tile_bytes = tm * d_pad * 4                                  # one f32 tile
    live_bytes = 4 * tile_bytes + 2 * tm * f_chunk * 4           # h/x/xn/out + h1
    resident_need = weight_bytes + small_bytes + 4 * tile_bytes + live_bytes

    if mode == "auto":
        # Stream per-sublayer weights when resident weights do not fit the
        # per-chip budget (v7x: 64 MiB/TC -> default 40 MiB budget).
        mode = "resident" if resident_need <= resident_budget_bytes else "stream"

    flops = 4 * t_pad * n_sub * d_pad * f_pad            # ff1 + ff2 MXU flops
    cost = pl.CostEstimate(
        flops=int(flops),
        transcendentals=int(t_pad * (n_sub + 1)),        # rsqrt per layer + sigmoid
        bytes_accessed=int(2 * t_pad * d_pad * routed.dtype.itemsize
                           + weight_bytes + small_bytes))

    args = (x_p, prepared["cent_row"], prepared["ln_g"], prepared["ln_b"],
            prepared["w1"], prepared["b1"], prepared["w2"], prepared["b2"])

    if mode == "resident":
        kernel = functools.partial(_expert_kernel_resident, n_sublayers=n_sub,
                                   d_real=d, ln_eps=LN_EPS, f_chunk=f_chunk)
        vmem_limit = int(min(max(resident_need + 4 * _MIB, 16 * _MIB),
                             56 * _MIB))

        def build(buffered_weights):
            if buffered_weights:
                # Constant index_map -> a single pipeline buffer is enough;
                # halves the resident weight VMEM footprint.
                def const_spec(shape, imap):
                    return pl.BlockSpec(shape, imap,
                                        pipeline_mode=pl.Buffered(1))
            else:
                def const_spec(shape, imap):
                    return pl.BlockSpec(shape, imap)
            r3 = lambda i: (0, 0, 0)
            return pl.pallas_call(
                kernel,
                out_shape=jax.ShapeDtypeStruct((t_pad, d_pad), routed.dtype),
                grid_spec=pltpu.PrefetchScalarGridSpec(
                    num_scalar_prefetch=0,
                    grid=(t_pad // tm,),
                    in_specs=[
                        pl.BlockSpec((tm, d_pad), lambda i: (i, 0)),  # tokens
                        const_spec((1, d_pad), lambda i: (0, 0)),     # centroid
                        const_spec(prepared["ln_g"].shape, r3),
                        const_spec(prepared["ln_b"].shape, r3),
                        const_spec(prepared["w1"].shape, r3),
                        const_spec(prepared["b1"].shape, r3),
                        const_spec(prepared["w2"].shape, r3),
                        const_spec(prepared["b2"].shape, r3),
                    ],
                    out_specs=pl.BlockSpec((tm, d_pad), lambda i: (i, 0)),
                ),
                compiler_params=pltpu.CompilerParams(
                    dimension_semantics=("parallel",),
                    vmem_limit_bytes=vmem_limit),
                cost_estimate=cost,
            )

        try:
            out = build(True)(*args)
        except Exception:
            # TODO(synk): pl.Buffered(1) (single-buffered resident weights) is
            # not supported by this jax version; fall back to default 2-deep
            # buffering (2x weight VMEM, otherwise identical).
            out = build(False)(*args)
    else:
        kernel = functools.partial(_expert_kernel_stream, d_real=d,
                                   ln_eps=LN_EPS, f_chunk=f_chunk)
        per_layer_w = 2 * d_pad * f_pad * wbytes
        vmem_limit = int(min(max(2 * per_layer_w + small_bytes + 4 * tile_bytes
                                 + live_bytes + 4 * _MIB, 16 * _MIB),
                             56 * _MIB))
        out = pl.pallas_call(
            kernel,
            out_shape=jax.ShapeDtypeStruct((t_pad, d_pad), routed.dtype),
            grid_spec=pltpu.PrefetchScalarGridSpec(
                num_scalar_prefetch=0,
                grid=(t_pad // tm, n_sub),
                in_specs=[
                    pl.BlockSpec((tm, d_pad), lambda i, l: (i, 0)),
                    pl.BlockSpec((1, d_pad), lambda i, l: (0, 0)),
                    pl.BlockSpec((1, 1, d_pad), lambda i, l: (l, 0, 0)),
                    pl.BlockSpec((1, 1, d_pad), lambda i, l: (l, 0, 0)),
                    pl.BlockSpec((1, d_pad, f_pad), lambda i, l: (l, 0, 0)),
                    pl.BlockSpec((1, 1, f_pad), lambda i, l: (l, 0, 0)),
                    pl.BlockSpec((1, f_pad, d_pad), lambda i, l: (l, 0, 0)),
                    pl.BlockSpec((1, 1, d_pad), lambda i, l: (l, 0, 0)),
                ],
                out_specs=pl.BlockSpec((tm, d_pad), lambda i, l: (i, 0)),
                scratch_shapes=[pltpu.VMEM((tm, d_pad), jnp.float32),  # h
                                pltpu.VMEM((tm, 1), jnp.float32)],     # alpha
            ),
            compiler_params=pltpu.CompilerParams(
                dimension_semantics=("parallel", "arbitrary"),
                vmem_limit_bytes=vmem_limit),
            cost_estimate=cost,
        )(*args)

    return out[:t, :d]


# --------------------------- affinity kernel (E > 1 only) --------------------
# token_expert_affinities = make_finite(features @ expert_centroids.T)
# Only used when num_experts > 1; with E == 1 the routing path is skipped.
def _affinity_kernel(feat_ref, cent_ref, out_ref):
    feats = feat_ref[...].astype(jnp.float32)          # [T, D]
    cents = cent_ref[...].astype(jnp.float32)          # [E, D]
    # Contract on the embed dim directly -- no in-kernel transpose (XLU pass).
    s = lax.dot_general(feats, cents, (((1,), (1,)), ((), ())),
                        preferred_element_type=jnp.float32)   # [T, E]
    finite = jnp.isfinite(s)
    fmin = jnp.min(jnp.where(finite, s, jnp.finfo(jnp.float32).max))
    out_ref[...] = jnp.where(finite, s, fmin)


def token_expert_affinities(features, centroids):
    # TODO(synk): before multi-expert use -- tile T over a grid (needs a
    # 2-pass global min for make_finite), pad E to a multiple of 128 for
    # lane-dense stores, and fuse the argmax so only [T,1] ids hit HBM.
    t, _ = features.shape
    e, _ = centroids.shape
    return pl.pallas_call(
        _affinity_kernel,
        out_shape=jax.ShapeDtypeStruct((t, e), jnp.float32),
        grid=(1,),
        in_specs=[
            pl.BlockSpec(features.shape, lambda i: (0, 0)),
            pl.BlockSpec(centroids.shape, lambda i: (0, 0)),
        ],
        out_specs=pl.BlockSpec((t, e), lambda i: (0, 0)),
    )(features, centroids)


# ------------------------------ glue (JAX) -----------------------------------
def base_layer_forward(input_features, centroids, prepared,
                       expert_id=EXPERT_ID, capacity_factor=CAPACITY_FACTOR,
                       tm=256, f_chunk=512, mode="auto"):
    b, s, d = input_features.shape
    features = input_features.reshape(-1, d)
    tpe = features.shape[0]
    num_experts = centroids.shape[0]

    if num_experts == 1:
        # Routing is the identity (argmax over one column + stable sort):
        # skip affinity kernel, argmax, argsort and both gathers entirely.
        sort_by_expert = None
        routed = features
    else:
        # TODO(synk): multi-expert routing needs All2AllDDM (cross-device
        # all_to_all); single-device path only.  Sort/gather stay in XLA.
        aff = token_expert_affinities(features, centroids)
        sort_by_expert = jnp.argsort(jnp.argmax(aff, axis=1))
        routed = jnp.take(features, sort_by_expert, axis=0)

    capacity = int(tpe * capacity_factor)
    if routed.shape[0] <= capacity:
        routed = expert_forward(routed, prepared, tm=tm, f_chunk=f_chunk,
                                mode=mode)
    else:
        # Tokens past capacity bypass the expert (module's drop semantics).
        head = expert_forward(routed[:capacity], prepared, tm=tm,
                              f_chunk=f_chunk, mode=mode)
        routed = jnp.concatenate([head, routed[capacity:]], axis=0)

    if sort_by_expert is not None:
        inv = jnp.zeros_like(sort_by_expert).at[sort_by_expert].set(
            jnp.arange(sort_by_expert.shape[0], dtype=sort_by_expert.dtype))
        routed = jnp.take(routed, inv, axis=0)

    return (routed.reshape(input_features.shape), None, None, 0.0, 0.0)


# --------------------------- pure-JAX reference ------------------------------
def _reference(input_features, centroids, expert_params,
               expert_id=EXPERT_ID, capacity_factor=CAPACITY_FACTOR):
    b, s, d = input_features.shape
    feats = input_features.reshape(-1, d)
    aff = feats @ centroids.T
    order = jnp.argsort(jnp.argmax(aff, axis=1))
    routed = feats[order]
    capacity = int(feats.shape[0] * capacity_factor)

    def expert(x):
        ln_g, ln_b, w1, b1, w2, b2 = expert_params
        alpha = jax.nn.sigmoid(x @ centroids[expert_id])[:, None]
        h = x
        for l in range(ln_g.shape[0]):
            mu = jnp.mean(h, axis=-1, keepdims=True)
            var = jnp.mean((h - mu) ** 2, axis=-1, keepdims=True)
            xn = (h - mu) / jnp.sqrt(var + LN_EPS) * ln_g[l] + ln_b[l]
            h1 = jnp.maximum(xn @ w1[l] + b1[l], 0.0)
            h = h + (h1 @ w2[l] + b2[l])
        return alpha * h + (1 - alpha) * x

    if routed.shape[0] <= capacity:
        routed = expert(routed)
    else:
        routed = jnp.concatenate([expert(routed[:capacity]),
                                  routed[capacity:]], axis=0)
    inv = jnp.zeros_like(order).at[order].set(jnp.arange(order.shape[0]))
    return routed[inv].reshape(input_features.shape)


# ----------------------------------- main ------------------------------------
def make_params(key):
    ks = jax.random.split(key, 1 + 4 * L)
    # expert_centroids ~ orthogonal init, gain 0.1
    centroids = jax.nn.initializers.orthogonal(scale=0.1)(
        ks[0], (E, D), jnp.float32)

    ln_g, ln_b, w1, b1, w2, b2 = [], [], [], [], [], []
    for l in range(L):
        k1, k2, k3, k4 = ks[1 + 4 * l:5 + 4 * l]
        # fairseq LayerNorm: weight=1, bias=0
        ln_g.append(jnp.ones((1, D), jnp.float32))
        ln_b.append(jnp.zeros((1, D), jnp.float32))
        bound1 = 1.0 / np.sqrt(D)
        w1.append(jax.random.uniform(k1, (D, F), jnp.float32, -bound1, bound1))
        b1.append(jax.random.uniform(k2, (1, F), jnp.float32, -bound1, bound1))
        # NOTE: the PyTorch module zero-inits ff2.weight; random values here so
        # the test exercises the second matmul (forward semantics identical).
        bound2 = 1.0 / np.sqrt(F)
        w2.append(jax.random.uniform(k3, (F, D), jnp.float32, -bound2, bound2))
        b2.append(jax.random.uniform(k4, (1, D), jnp.float32, -bound2, bound2))
    params = tuple(jnp.stack(p, axis=0) for p in (ln_g, ln_b, w1, b1, w2, b2))
    return centroids, params


if __name__ == "__main__":
    key = jax.random.PRNGKey(0)
    k_in, k_par = jax.random.split(key)

    input_features = jax.random.normal(k_in, (B, S, D), jnp.float32)
    centroids, expert_params = make_params(k_par)

    ref = _reference(input_features, centroids, expert_params)

    # 1) f32 path, resident-weight kernel; tm=8 -> multi-step token grid.
    prep_f32 = prepare_expert_params(centroids, expert_params, EXPERT_ID,
                                     compute_dtype=jnp.float32)
    out, _, _, balance_loss, distill_loss = base_layer_forward(
        input_features, centroids, prep_f32, tm=8, mode="resident")
    out = jax.block_until_ready(out)
    np.testing.assert_allclose(np.asarray(out), np.asarray(ref),
                               rtol=1e-4, atol=1e-4)
    assert out.shape == input_features.shape

    # 2) sublayer-streaming kernel (the v7x / large-model VMEM path).
    out_s, _, _, _, _ = base_layer_forward(input_features, centroids,
                                           prep_f32, tm=8, mode="stream")
    out_s = jax.block_until_ready(out_s)
    np.testing.assert_allclose(np.asarray(out_s), np.asarray(ref),
                               rtol=1e-4, atol=1e-4)

    # 3) bf16 MXU operands / f32 accumulate (v6e / v7x peak path).
    prep_bf16 = prepare_expert_params(centroids, expert_params, EXPERT_ID,
                                      compute_dtype=jnp.bfloat16)
    out_bf, _, _, _, _ = base_layer_forward(input_features, centroids,
                                            prep_bf16, tm=8)
    out_bf = jax.block_until_ready(out_bf)
    np.testing.assert_allclose(np.asarray(out_bf), np.asarray(ref),
                               rtol=1e-1, atol=1e-1)

    # 4) capacity-drop branch: tokens past capacity bypass the expert.
    ref_drop = _reference(input_features, centroids, expert_params,
                          capacity_factor=0.5)
    out_drop, _, _, _, _ = base_layer_forward(input_features, centroids,
                                              prep_f32, capacity_factor=0.5,
                                              tm=8)
    out_drop = jax.block_until_ready(out_drop)
    np.testing.assert_allclose(np.asarray(out_drop), np.asarray(ref_drop),
                               rtol=1e-4, atol=1e-4)

    print("KERNEL_OK")
</pallas_src>

<mosaic_0001>
module attributes {stable_mosaic.version = 11 : i64} {
  func.func @_expert_kernel_resident(%arg0: i32, %arg1: memref<8x128xf32, #tpu.memory_space<vmem>>, %arg2: memref<1x128xf32, #tpu.memory_space<vmem>>, %arg3: memref<2x1x128xf32, #tpu.memory_space<vmem>>, %arg4: memref<2x1x128xf32, #tpu.memory_space<vmem>>, %arg5: memref<2x128x128xf32, #tpu.memory_space<vmem>>, %arg6: memref<2x1x128xf32, #tpu.memory_space<vmem>>, %arg7: memref<2x128x128xf32, #tpu.memory_space<vmem>>, %arg8: memref<2x1x128xf32, #tpu.memory_space<vmem>>, %arg9: memref<8x128xf32, #tpu.memory_space<vmem>>) attributes {dimension_semantics = [#tpu.dimension_semantics<parallel>], iteration_bounds = array<i64: 2>, scalar_prefetch = 0 : i64, scratch_operands = 0 : i64, tpu.core_type = #tpu.core_type<tc>, window_params = [{transform_indices = @transform_0, window_bounds = array<i64: 8, 128>}, {pipeline_mode = #tpu.pipeline_mode<synchronous>, transform_indices = @transform_1, window_bounds = array<i64: 1, 128>}, {pipeline_mode = #tpu.pipeline_mode<synchronous>, transform_indices = @transform_2, window_bounds = array<i64: 2, 1, 128>}, {pipeline_mode = #tpu.pipeline_mode<synchronous>, transform_indices = @transform_3, window_bounds = array<i64: 2, 1, 128>}, {pipeline_mode = #tpu.pipeline_mode<synchronous>, transform_indices = @transform_4, window_bounds = array<i64: 2, 128, 128>}, {pipeline_mode = #tpu.pipeline_mode<synchronous>, transform_indices = @transform_5, window_bounds = array<i64: 2, 1, 128>}, {pipeline_mode = #tpu.pipeline_mode<synchronous>, transform_indices = @transform_6, window_bounds = array<i64: 2, 128, 128>}, {pipeline_mode = #tpu.pipeline_mode<synchronous>, transform_indices = @transform_7, window_bounds = array<i64: 2, 1, 128>}, {transform_indices = @transform_8, window_bounds = array<i64: 8, 128>}]} {
    %c0 = arith.constant 0 : index
    %c0_0 = arith.constant 0 : index
    %0 = vector.load %arg1[%c0, %c0_0] : memref<8x128xf32, #tpu.memory_space<vmem>>, vector<8x128xf32>
    %c0_1 = arith.constant 0 : index
    %c0_2 = arith.constant 0 : index
    %1 = vector.load %arg2[%c0_1, %c0_2] : memref<1x128xf32, #tpu.memory_space<vmem>>, vector<1x128xf32>
    %2 = vector.broadcast %1 : vector<1x128xf32> to vector<8x128xf32>
    %3 = arith.mulf %0, %2 : vector<8x128xf32>
    %cst = arith.constant dense<0.000000e+00> : vector<8xf32>
    %4 = vector.multi_reduction <add>, %3, %cst [1] : vector<8x128xf32> to vector<8xf32>
    %5 = vector.shape_cast %4 : vector<8xf32> to vector<8x1xf32>
    %6 = arith.negf %5 : vector<8x1xf32>
    %7 = math.exp %6 : vector<8x1xf32>
    %cst_3 = arith.constant 1.000000e+00 : f32
    %8 = vector.broadcast %cst_3 : f32 to vector<8x1xf32>
    %9 = arith.addf %8, %7 : vector<8x1xf32>
    %10 = arith.divf %8, %9 : vector<8x1xf32>
    %c0_4 = arith.constant 0 : index
    %c0_5 = arith.constant 0 : index
    %c0_6 = arith.constant 0 : index
    %11 = vector.load %arg3[%c0_4, %c0_5, %c0_6] : memref<2x1x128xf32, #tpu.memory_space<vmem>>, vector<1x1x128xf32>
    %12 = vector.shape_cast %11 : vector<1x1x128xf32> to vector<1x128xf32>
    %c0_7 = arith.constant 0 : index
    %c0_8 = arith.constant 0 : index
    %c0_9 = arith.constant 0 : index
    %13 = vector.load %arg4[%c0_7, %c0_8, %c0_9] : memref<2x1x128xf32, #tpu.memory_space<vmem>>, vector<1x1x128xf32>
    %14 = vector.shape_cast %13 : vector<1x1x128xf32> to vector<1x128xf32>
    %cst_10 = arith.constant dense<0.000000e+00> : vector<8xf32>
    %15 = vector.multi_reduction <add>, %0, %cst_10 [1] : vector<8x128xf32> to vector<8xf32>
    %16 = vector.shape_cast %15 : vector<8xf32> to vector<8x1xf32>
    %cst_11 = arith.constant 3.125000e-02 : f32
    %17 = vector.broadcast %cst_11 : f32 to vector<8x1xf32>
    %18 = arith.mulf %16, %17 : vector<8x1xf32>
    %19 = arith.mulf %0, %0 : vector<8x128xf32>
    %cst_12 = arith.constant dense<0.000000e+00> : vector<8xf32>
    %20 = vector.multi_reduction <add>, %19, %cst_12 [1] : vector<8x128xf32> to vector<8xf32>
    %21 = vector.shape_cast %20 : vector<8xf32> to vector<8x1xf32>
    %cst_13 = arith.constant 3.125000e-02 : f32
    %22 = vector.broadcast %cst_13 : f32 to vector<8x1xf32>
    %23 = arith.mulf %21, %22 : vector<8x1xf32>
    %24 = arith.mulf %18, %18 : vector<8x1xf32>
    %25 = arith.subf %23, %24 : vector<8x1xf32>
    %cst_14 = arith.constant 0.000000e+00 : f32
    %26 = vector.broadcast %cst_14 : f32 to vector<8x1xf32>
    %27 = arith.maximumf %25, %26 : vector<8x1xf32>
    %28 = vector.broadcast %18 : vector<8x1xf32> to vector<8x128xf32>
    %29 = arith.subf %0, %28 : vector<8x128xf32>
    %cst_15 = arith.constant 9.99999974E-6 : f32
    %30 = vector.broadcast %cst_15 : f32 to vector<8x1xf32>
    %31 = arith.addf %27, %30 : vector<8x1xf32>
    %32 = math.rsqrt %31 : vector<8x1xf32>
    %33 = vector.broadcast %32 : vector<8x1xf32> to vector<8x128xf32>
    %34 = arith.mulf %29, %33 : vector<8x128xf32>
    %35 = vector.broadcast %12 : vector<1x128xf32> to vector<8x128xf32>
    %36 = arith.mulf %34, %35 : vector<8x128xf32>
    %37 = vector.broadcast %14 : vector<1x128xf32> to vector<8x128xf32>
    %38 = arith.addf %36, %37 : vector<8x128xf32>
    %c0_16 = arith.constant 0 : index
    %c0_17 = arith.constant 0 : index
    %c0_18 = arith.constant 0 : index
    %39 = vector.load %arg8[%c0_16, %c0_17, %c0_18] : memref<2x1x128xf32, #tpu.memory_space<vmem>>, vector<1x1x128xf32>
    %40 = vector.shape_cast %39 : vector<1x1x128xf32> to vector<1x128xf32>
    %c0_19 = arith.constant 0 : index
    %c0_20 = arith.constant 0 : index
    %c0_21 = arith.constant 0 : index
    %41 = vector.load %arg5[%c0_19, %c0_20, %c0_21] : memref<2x128x128xf32, #tpu.memory_space<vmem>>, vector<1x128x128xf32>
    %42 = vector.shape_cast %41 : vector<1x128x128xf32> to vector<128x128xf32>
    %cst_22 = arith.constant dense<0.000000e+00> : vector<8x128xf32>
    %43 = tpu.matmul %38, %42, %cst_22 {dimension_numbers = #tpu.dot_dimension_numbers<[1], [0], [0], [1], [0, 0, 1, 1], [], []>} : vector<8x128xf32>, vector<128x128xf32>, vector<8x128xf32> -> vector<8x128xf32>
    %c0_23 = arith.constant 0 : index
    %c0_24 = arith.constant 0 : index
    %c0_25 = arith.constant 0 : index
    %44 = vector.load %arg6[%c0_23, %c0_24, %c0_25] : memref<2x1x128xf32, #tpu.memory_space<vmem>>, vector<1x1x128xf32>
    %45 = vector.shape_cast %44 : vector<1x1x128xf32> to vector<1x128xf32>
    %46 = vector.broadcast %45 : vector<1x128xf32> to vector<8x128xf32>
    %47 = arith.addf %43, %46 : vector<8x128xf32>
    %cst_26 = arith.constant 0.000000e+00 : f32
    %48 = vector.broadcast %cst_26 : f32 to vector<8x128xf32>
    %49 = arith.maximumf %47, %48 : vector<8x128xf32>
    %c0_27 = arith.constant 0 : index
    %c0_28 = arith.constant 0 : index
    %c0_29 = arith.constant 0 : index
    %50 = vector.load %arg7[%c0_27, %c0_28, %c0_29] : memref<2x128x128xf32, #tpu.memory_space<vmem>>, vector<1x128x128xf32>
    %51 = vector.shape_cast %50 : vector<1x128x128xf32> to vector<128x128xf32>
    %cst_30 = arith.constant dense<0.000000e+00> : vector<8x128xf32>
    %52 = tpu.matmul %49, %51, %cst_30 {dimension_numbers = #tpu.dot_dimension_numbers<[1], [0], [0], [1], [0, 0, 1, 1], [], []>} : vector<8x128xf32>, vector<128x128xf32>, vector<8x128xf32> -> vector<8x128xf32>
    %53 = vector.broadcast %40 : vector<1x128xf32> to vector<8x128xf32>
    %54 = arith.addf %53, %52 : vector<8x128xf32>
    %55 = arith.addf %0, %54 : vector<8x128xf32>
    %c1 = arith.constant 1 : index
    %c0_31 = arith.constant 0 : index
    %c0_32 = arith.constant 0 : index
    %56 = vector.load %arg3[%c1, %c0_31, %c0_32] : memref<2x1x128xf32, #tpu.memory_space<vmem>>, vector<1x1x128xf32>
    %57 = vector.shape_cast %56 : vector<1x1x128xf32> to vector<1x128xf32>
    %c1_33 = arith.constant 1 : index
    %c0_34 = arith.constant 0 : index
    %c0_35 = arith.constant 0 : index
    %58 = vector.load %arg4[%c1_33, %c0_34, %c0_35] : memref<2x1x128xf32, #tpu.memory_space<vmem>>, vector<1x1x128xf32>
    %59 = vector.shape_cast %58 : vector<1x1x128xf32> to vector<1x128xf32>
    %cst_36 = arith.constant dense<0.000000e+00> : vector<8xf32>
    %60 = vector.multi_reduction <add>, %55, %cst_36 [1] : vector<8x128xf32> to vector<8xf32>
    %61 = vector.shape_cast %60 : vector<8xf32> to vector<8x1xf32>
    %cst_37 = arith.constant 3.125000e-02 : f32
    %62 = vector.broadcast %cst_37 : f32 to vector<8x1xf32>
    %63 = arith.mulf %61, %62 : vector<8x1xf32>
    %64 = arith.mulf %55, %55 : vector<8x128xf32>
    %cst_38 = arith.constant dense<0.000000e+00> : vector<8xf32>
    %65 = vector.multi_reduction <add>, %64, %cst_38 [1] : vector<8x128xf32> to vector<8xf32>
    %66 = vector.shape_cast %65 : vector<8xf32> to vector<8x1xf32>
    %cst_39 = arith.constant 3.125000e-02 : f32
    %67 = vector.broadcast %cst_39 : f32 to vector<8x1xf32>
    %68 = arith.mulf %66, %67 : vector<8x1xf32>
    %69 = arith.mulf %63, %63 : vector<8x1xf32>
    %70 = arith.subf %68, %69 : vector<8x1xf32>
    %cst_40 = arith.constant 0.000000e+00 : f32
    %71 = vector.broadcast %cst_40 : f32 to vector<8x1xf32>
    %72 = arith.maximumf %70, %71 : vector<8x1xf32>
    %73 = vector.broadcast %63 : vector<8x1xf32> to vector<8x128xf32>
    %74 = arith.subf %55, %73 : vector<8x128xf32>
    %cst_41 = arith.constant 9.99999974E-6 : f32
    %75 = vector.broadcast %cst_41 : f32 to vector<8x1xf32>
    %76 = arith.addf %72, %75 : vector<8x1xf32>
    %77 = math.rsqrt %76 : vector<8x1xf32>
    %78 = vector.broadcast %77 : vector<8x1xf32> to vector<8x128xf32>
    %79 = arith.mulf %74, %78 : vector<8x128xf32>
    %80 = vector.broadcast %57 : vector<1x128xf32> to vector<8x128xf32>
    %81 = arith.mulf %79, %80 : vector<8x128xf32>
    %82 = vector.broadcast %59 : vector<1x128xf32> to vector<8x128xf32>
    %83 = arith.addf %81, %82 : vector<8x128xf32>
    %c1_42 = arith.constant 1 : index
    %c0_43 = arith.constant 0 : index
    %c0_44 = arith.constant 0 : index
    %84 = vector.load %arg8[%c1_42, %c0_43, %c0_44] : memref<2x1x128xf32, #tpu.memory_space<vmem>>, vector<1x1x128xf32>
    %85 = vector.shape_cast %84 : vector<1x1x128xf32> to vector<1x128xf32>
    %c1_45 = arith.constant 1 : index
    %c0_46 = arith.constant 0 : index
    %c0_47 = arith.constant 0 : index
    %86 = vector.load %arg5[%c1_45, %c0_46, %c0_47] : memref<2x128x128xf32, #tpu.memory_space<vmem>>, vector<1x128x128xf32>
    %87 = vector.shape_cast %86 : vector<1x128x128xf32> to vector<128x128xf32>
    %cst_48 = arith.constant dense<0.000000e+00> : vector<8x128xf32>
    %88 = tpu.matmul %83, %87, %cst_48 {dimension_numbers = #tpu.dot_dimension_numbers<[1], [0], [0], [1], [0, 0, 1, 1], [], []>} : vector<8x128xf32>, vector<128x128xf32>, vector<8x128xf32> -> vector<8x128xf32>
    %c1_49 = arith.constant 1 : index
    %c0_50 = arith.constant 0 : index
    %c0_51 = arith.constant 0 : index
    %89 = vector.load %arg6[%c1_49, %c0_50, %c0_51] : memref<2x1x128xf32, #tpu.memory_space<vmem>>, vector<1x1x128xf32>
    %90 = vector.shape_cast %89 : vector<1x1x128xf32> to vector<1x128xf32>
    %91 = vector.broadcast %90 : vector<1x128xf32> to vector<8x128xf32>
    %92 = arith.addf %88, %91 : vector<8x128xf32>
    %cst_52 = arith.constant 0.000000e+00 : f32
    %93 = vector.broadcast %cst_52 : f32 to vector<8x128xf32>
    %94 = arith.maximumf %92, %93 : vector<8x128xf32>
    %c1_53 = arith.constant 1 : index
    %c0_54 = arith.constant 0 : index
    %c0_55 = arith.constant 0 : index
    %95 = vector.load %arg7[%c1_53, %c0_54, %c0_55] : memref<2x128x128xf32, #tpu.memory_space<vmem>>, vector<1x128x128xf32>
    %96 = vector.shape_cast %95 : vector<1x128x128xf32> to vector<128x128xf32>
    %cst_56 = arith.constant dense<0.000000e+00> : vector<8x128xf32>
    %97 = tpu.matmul %94, %96, %cst_56 {dimension_numbers = #tpu.dot_dimension_numbers<[1], [0], [0], [1], [0, 0, 1, 1], [], []>} : vector<8x128xf32>, vector<128x128xf32>, vector<8x128xf32> -> vector<8x128xf32>
    %98 = vector.broadcast %85 : vector<1x128xf32> to vector<8x128xf32>
    %99 = arith.addf %98, %97 : vector<8x128xf32>
    %100 = arith.addf %55, %99 : vector<8x128xf32>
    %c0_57 = arith.constant 0 : index
    %c0_58 = arith.constant 0 : index
    %101 = vector.load %arg1[%c0_57, %c0_58] : memref<8x128xf32, #tpu.memory_space<vmem>>, vector<8x128xf32>
    %102 = vector.broadcast %10 : vector<8x1xf32> to vector<8x128xf32>
    %103 = arith.mulf %102, %100 : vector<8x128xf32>
    %cst_59 = arith.constant 1.000000e+00 : f32
    %104 = vector.broadcast %cst_59 : f32 to vector<8x1xf32>
    %105 = arith.subf %104, %10 : vector<8x1xf32>
    %106 = vector.broadcast %105 : vector<8x1xf32> to vector<8x128xf32>
    %107 = arith.mulf %106, %101 : vector<8x128xf32>
    %108 = arith.addf %103, %107 : vector<8x128xf32>
    %c0_60 = arith.constant 0 : index
    %c0_61 = arith.constant 0 : index
    %109 = vector.load %arg9[%c0_60, %c0_61] : memref<8x128xf32, #tpu.memory_space<vmem>>, vector<8x128xf32>
    tpu.vector_store %arg9[%c0_60, %c0_61], %108 {strides = array<i32>} : memref<8x128xf32, #tpu.memory_space<vmem>>, vector<8x128xf32>,
    return
  }
  func.func @transform_0(%arg0: i32) -> (i32, i32) {
    %c0_i32 = arith.constant 0 : i32
    %c0_i32_0 = arith.constant 0 : i32
    return %arg0, %c0_i32 : i32, i32
  }
  func.func @transform_1(%arg0: i32) -> (i32, i32) {
    %c0_i32 = arith.constant 0 : i32
    %c0_i32_0 = arith.constant 0 : i32
    %c0_i32_1 = arith.constant 0 : i32
    return %c0_i32, %c0_i32_0 : i32, i32
  }
  func.func @transform_2(%arg0: i32) -> (i32, i32, i32) {
    %c0_i32 = arith.constant 0 : i32
    %c0_i32_0 = arith.constant 0 : i32
    %c0_i32_1 = arith.constant 0 : i32
    %c0_i32_2 = arith.constant 0 : i32
    return %c0_i32, %c0_i32_0, %c0_i32_1 : i32, i32, i32
  }
  func.func @transform_3(%arg0: i32) -> (i32, i32, i32) {
    %c0_i32 = arith.constant 0 : i32
    %c0_i32_0 = arith.constant 0 : i32
    %c0_i32_1 = arith.constant 0 : i32
    %c0_i32_2 = arith.constant 0 : i32
    return %c0_i32, %c0_i32_0, %c0_i32_1 : i32, i32, i32
  }
  func.func @transform_4(%arg0: i32) -> (i32, i32, i32) {
    %c0_i32 = arith.constant 0 : i32
    %c0_i32_0 = arith.constant 0 : i32
    %c0_i32_1 = arith.constant 0 : i32
    %c0_i32_2 = arith.constant 0 : i32
    return %c0_i32, %c0_i32_0, %c0_i32_1 : i32, i32, i32
  }
  func.func @transform_5(%arg0: i32) -> (i32, i32, i32) {
    %c0_i32 = arith.constant 0 : i32
    %c0_i32_0 = arith.constant 0 : i32
    %c0_i32_1 = arith.constant 0 : i32
    %c0_i32_2 = arith.constant 0 : i32
    return %c0_i32, %c0_i32_0, %c0_i32_1 : i32, i32, i32
  }
  func.func @transform_6(%arg0: i32) -> (i32, i32, i32) {
    %c0_i32 = arith.constant 0 : i32
    %c0_i32_0 = arith.constant 0 : i32
    %c0_i32_1 = arith.constant 0 : i32
    %c0_i32_2 = arith.constant 0 : i32
    return %c0_i32, %c0_i32_0, %c0_i32_1 : i32, i32, i32
  }
  func.func @transform_7(%arg0: i32) -> (i32, i32, i32) {
    %c0_i32 = arith.constant 0 : i32
    %c0_i32_0 = arith.constant 0 : i32
    %c0_i32_1 = arith.constant 0 : i32
    %c0_i32_2 = arith.constant 0 : i32
    return %c0_i32, %c0_i32_0, %c0_i32_1 : i32, i32, i32
  }
  func.func @transform_8(%arg0: i32) -> (i32, i32) {
    %c0_i32 = arith.constant 0 : i32
    %c0_i32_0 = arith.constant 0 : i32
    return %arg0, %c0_i32 : i32, i32
  }
}

module attributes {stable_mosaic.version = 11 : i64} {
  func.func @_expert_kernel_resident(%arg0: i32, %arg1: memref<8x128xf32, #tpu.memory_space<vmem>>, %arg2: memref<1x128xf32, #tpu.memory_space<vmem>>, %arg3: memref<2x1x128xf32, #tpu.memory_space<vmem>>, %arg4: memref<2x1x128xf32, #tpu.memory_space<vmem>>, %arg5: memref<2x128x128xf32, #tpu.memory_space<vmem>>, %arg6: memref<2x1x128xf32, #tpu.memory_space<vmem>>, %arg7: memref<2x128x128xf32, #tpu.memory_space<vmem>>, %arg8: memref<2x1x128xf32, #tpu.memory_space<vmem>>, %arg9: memref<8x128xf32, #tpu.memory_space<vmem>>) attributes {dimension_semantics = [#tpu.dimension_semantics<parallel>], iteration_bounds = array<i64: 2>, scalar_prefetch = 0 : i64, scratch_operands = 0 : i64, tpu.core_type = #tpu.core_type<tc>, window_params = [{transform_indices = @transform_0, window_bounds = array<i64: 8, 128>}, {pipeline_mode = #tpu.pipeline_mode<synchronous>, transform_indices = @transform_1, window_bounds = array<i64: 1, 128>}, {pipeline_mode = #tpu.pipeline_mode<synchronous>, transform_indices = @transform_2, window_bounds = array<i64: 2, 1, 128>}, {pipeline_mode = #tpu.pipeline_mode<synchronous>, transform_indices = @transform_3, window_bounds = array<i64: 2, 1, 128>}, {pipeline_mode = #tpu.pipeline_mode<synchronous>, transform_indices = @transform_4, window_bounds = array<i64: 2, 128, 128>}, {pipeline_mode = #tpu.pipeline_mode<synchronous>, transform_indices = @transform_5, window_bounds = array<i64: 2, 1, 128>}, {pipeline_mode = #tpu.pipeline_mode<synchronous>, transform_indices = @transform_6, window_bounds = array<i64: 2, 128, 128>}, {pipeline_mode = #tpu.pipeline_mode<synchronous>, transform_indices = @transform_7, window_bounds = array<i64: 2, 1, 128>}, {transform_indices = @transform_8, window_bounds = array<i64: 8, 128>}]} {
    %c0 = arith.constant 0 : index
    %c0_0 = arith.constant 0 : index
    %0 = vector.load %arg1[%c0, %c0_0] : memref<8x128xf32, #tpu.memory_space<vmem>>, vector<8x128xf32>
    %c0_1 = arith.constant 0 : index
    %c0_2 = arith.constant 0 : index
    %1 = vector.load %arg2[%c0_1, %c0_2] : memref<1x128xf32, #tpu.memory_space<vmem>>, vector<1x128xf32>
    %2 = vector.broadcast %1 : vector<1x128xf32> to vector<8x128xf32>
    %3 = arith.mulf %0, %2 : vector<8x128xf32>
    %cst = arith.constant dense<0.000000e+00> : vector<8xf32>
    %4 = vector.multi_reduction <add>, %3, %cst [1] : vector<8x128xf32> to vector<8xf32>
    %5 = vector.shape_cast %4 : vector<8xf32> to vector<8x1xf32>
    %6 = arith.negf %5 : vector<8x1xf32>
    %7 = math.exp %6 : vector<8x1xf32>
    %cst_3 = arith.constant 1.000000e+00 : f32
    %8 = vector.broadcast %cst_3 : f32 to vector<8x1xf32>
    %9 = arith.addf %8, %7 : vector<8x1xf32>
    %10 = arith.divf %8, %9 : vector<8x1xf32>
    %c0_4 = arith.constant 0 : index
    %c0_5 = arith.constant 0 : index
    %c0_6 = arith.constant 0 : index
    %11 = vector.load %arg3[%c0_4, %c0_5, %c0_6] : memref<2x1x128xf32, #tpu.memory_space<vmem>>, vector<1x1x128xf32>
    %12 = vector.shape_cast %11 : vector<1x1x128xf32> to vector<1x128xf32>
    %c0_7 = arith.constant 0 : index
    %c0_8 = arith.constant 0 : index
    %c0_9 = arith.constant 0 : index
    %13 = vector.load %arg4[%c0_7, %c0_8, %c0_9] : memref<2x1x128xf32, #tpu.memory_space<vmem>>, vector<1x1x128xf32>
    %14 = vector.shape_cast %13 : vector<1x1x128xf32> to vector<1x128xf32>
    %cst_10 = arith.constant dense<0.000000e+00> : vector<8xf32>
    %15 = vector.multi_reduction <add>, %0, %cst_10 [1] : vector<8x128xf32> to vector<8xf32>
    %16 = vector.shape_cast %15 : vector<8xf32> to vector<8x1xf32>
    %cst_11 = arith.constant 3.125000e-02 : f32
    %17 = vector.broadcast %cst_11 : f32 to vector<8x1xf32>
    %18 = arith.mulf %16, %17 : vector<8x1xf32>
    %19 = arith.mulf %0, %0 : vector<8x128xf32>
    %cst_12 = arith.constant dense<0.000000e+00> : vector<8xf32>
    %20 = vector.multi_reduction <add>, %19, %cst_12 [1] : vector<8x128xf32> to vector<8xf32>
    %21 = vector.shape_cast %20 : vector<8xf32> to vector<8x1xf32>
    %cst_13 = arith.constant 3.125000e-02 : f32
    %22 = vector.broadcast %cst_13 : f32 to vector<8x1xf32>
    %23 = arith.mulf %21, %22 : vector<8x1xf32>
    %24 = arith.mulf %18, %18 : vector<8x1xf32>
    %25 = arith.subf %23, %24 : vector<8x1xf32>
    %cst_14 = arith.constant 0.000000e+00 : f32
    %26 = vector.broadcast %cst_14 : f32 to vector<8x1xf32>
    %27 = arith.maximumf %25, %26 : vector<8x1xf32>
    %28 = vector.broadcast %18 : vector<8x1xf32> to vector<8x128xf32>
    %29 = arith.subf %0, %28 : vector<8x128xf32>
    %cst_15 = arith.constant 9.99999974E-6 : f32
    %30 = vector.broadcast %cst_15 : f32 to vector<8x1xf32>
    %31 = arith.addf %27, %30 : vector<8x1xf32>
    %32 = math.rsqrt %31 : vector<8x1xf32>
    %33 = vector.broadcast %32 : vector<8x1xf32> to vector<8x128xf32>
    %34 = arith.mulf %29, %33 : vector<8x128xf32>
    %35 = vector.broadcast %12 : vector<1x128xf32> to vector<8x128xf32>
    %36 = arith.mulf %34, %35 : vector<8x128xf32>
    %37 = vector.broadcast %14 : vector<1x128xf32> to vector<8x128xf32>
    %38 = arith.addf %36, %37 : vector<8x128xf32>
    %c0_16 = arith.constant 0 : index
    %c0_17 = arith.constant 0 : index
    %c0_18 = arith.constant 0 : index
    %39 = vector.load %arg8[%c0_16, %c0_17, %c0_18] : memref<2x1x128xf32, #tpu.memory_space<vmem>>, vector<1x1x128xf32>
    %40 = vector.shape_cast %39 : vector<1x1x128xf32> to vector<1x128xf32>
    %c0_19 = arith.constant 0 : index
    %c0_20 = arith.constant 0 : index
    %c0_21 = arith.constant 0 : index
    %41 = vector.load %arg5[%c0_19, %c0_20, %c0_21] : memref<2x128x128xf32, #tpu.memory_space<vmem>>, vector<1x128x128xf32>
    %42 = vector.shape_cast %41 : vector<1x128x128xf32> to vector<128x128xf32>
    %cst_22 = arith.constant dense<0.000000e+00> : vector<8x128xf32>
    %43 = tpu.matmul %38, %42, %cst_22 {dimension_numbers = #tpu.dot_dimension_numbers<[1], [0], [0], [1], [0, 0, 1, 1], [], []>} : vector<8x128xf32>, vector<128x128xf32>, vector<8x128xf32> -> vector<8x128xf32>
    %c0_23 = arith.constant 0 : index
    %c0_24 = arith.constant 0 : index
    %c0_25 = arith.constant 0 : index
    %44 = vector.load %arg6[%c0_23, %c0_24, %c0_25] : memref<2x1x128xf32, #tpu.memory_space<vmem>>, vector<1x1x128xf32>
    %45 = vector.shape_cast %44 : vector<1x1x128xf32> to vector<1x128xf32>
    %46 = vector.broadcast %45 : vector<1x128xf32> to vector<8x128xf32>
    %47 = arith.addf %43, %46 : vector<8x128xf32>
    %cst_26 = arith.constant 0.000000e+00 : f32
    %48 = vector.broadcast %cst_26 : f32 to vector<8x128xf32>
    %49 = arith.maximumf %47, %48 : vector<8x128xf32>
    %c0_27 = arith.constant 0 : index
    %c0_28 = arith.constant 0 : index
    %c0_29 = arith.constant 0 : index
    %50 = vector.load %arg7[%c0_27, %c0_28, %c0_29] : memref<2x128x128xf32, #tpu.memory_space<vmem>>, vector<1x128x128xf32>
    %51 = vector.shape_cast %50 : vector<1x128x128xf32> to vector<128x128xf32>
    %cst_30 = arith.constant dense<0.000000e+00> : vector<8x128xf32>
    %52 = tpu.matmul %49, %51, %cst_30 {dimension_numbers = #tpu.dot_dimension_numbers<[1], [0], [0], [1], [0, 0, 1, 1], [], []>} : vector<8x128xf32>, vector<128x128xf32>, vector<8x128xf32> -> vector<8x128xf32>
    %53 = vector.broadcast %40 : vector<1x128xf32> to vector<8x128xf32>
    %54 = arith.addf %53, %52 : vector<8x128xf32>
    %55 = arith.addf %0, %54 : vector<8x128xf32>
    %c1 = arith.constant 1 : index
    %c0_31 = arith.constant 0 : index
    %c0_32 = arith.constant 0 : index
    %56 = vector.load %arg3[%c1, %c0_31, %c0_32] : memref<2x1x128xf32, #tpu.memory_space<vmem>>, vector<1x1x128xf32>
    %57 = vector.shape_cast %56 : vector<1x1x128xf32> to vector<1x128xf32>
    %c1_33 = arith.constant 1 : index
    %c0_34 = arith.constant 0 : index
    %c0_35 = arith.constant 0 : index
    %58 = vector.load %arg4[%c1_33, %c0_34, %c0_35] : memref<2x1x128xf32, #tpu.memory_space<vmem>>, vector<1x1x128xf32>
    %59 = vector.shape_cast %58 : vector<1x1x128xf32> to vector<1x128xf32>
    %cst_36 = arith.constant dense<0.000000e+00> : vector<8xf32>
    %60 = vector.multi_reduction <add>, %55, %cst_36 [1] : vector<8x128xf32> to vector<8xf32>
    %61 = vector.shape_cast %60 : vector<8xf32> to vector<8x1xf32>
    %cst_37 = arith.constant 3.125000e-02 : f32
    %62 = vector.broadcast %cst_37 : f32 to vector<8x1xf32>
    %63 = arith.mulf %61, %62 : vector<8x1xf32>
    %64 = arith.mulf %55, %55 : vector<8x128xf32>
    %cst_38 = arith.constant dense<0.000000e+00> : vector<8xf32>
    %65 = vector.multi_reduction <add>, %64, %cst_38 [1] : vector<8x128xf32> to vector<8xf32>
    %66 = vector.shape_cast %65 : vector<8xf32> to vector<8x1xf32>
    %cst_39 = arith.constant 3.125000e-02 : f32
    %67 = vector.broadcast %cst_39 : f32 to vector<8x1xf32>
    %68 = arith.mulf %66, %67 : vector<8x1xf32>
    %69 = arith.mulf %63, %63 : vector<8x1xf32>
    %70 = arith.subf %68, %69 : vector<8x1xf32>
    %cst_40 = arith.constant 0.000000e+00 : f32
    %71 = vector.broadcast %cst_40 : f32 to vector<8x1xf32>
    %72 = arith.maximumf %70, %71 : vector<8x1xf32>
    %73 = vector.broadcast %63 : vector<8x1xf32> to vector<8x128xf32>
    %74 = arith.subf %55, %73 : vector<8x128xf32>
    %cst_41 = arith.constant 9.99999974E-6 : f32
    %75 = vector.broadcast %cst_41 : f32 to vector<8x1xf32>
    %76 = arith.addf %72, %75 : vector<8x1xf32>
    %77 = math.rsqrt %76 : vector<8x1xf32>
    %78 = vector.broadcast %77 : vector<8x1xf32> to vector<8x128xf32>
    %79 = arith.mulf %74, %78 : vector<8x128xf32>
    %80 = vector.broadcast %57 : vector<1x128xf32> to vector<8x128xf32>
    %81 = arith.mulf %79, %80 : vector<8x128xf32>
    %82 = vector.broadcast %59 : vector<1x128xf32> to vector<8x128xf32>
    %83 = arith.addf %81, %82 : vector<8x128xf32>
    %c1_42 = arith.constant 1 : index
    %c0_43 = arith.constant 0 : index
    %c0_44 = arith.constant 0 : index
    %84 = vector.load %arg8[%c1_42, %c0_43, %c0_44] : memref<2x1x128xf32, #tpu.memory_space<vmem>>, vector<1x1x128xf32>
    %85 = vector.shape_cast %84 : vector<1x1x128xf32> to vector<1x128xf32>
    %c1_45 = arith.constant 1 : index
    %c0_46 = arith.constant 0 : index
    %c0_47 = arith.constant 0 : index
    %86 = vector.load %arg5[%c1_45, %c0_46, %c0_47] : memref<2x128x128xf32, #tpu.memory_space<vmem>>, vector<1x128x128xf32>
    %87 = vector.shape_cast %86 : vector<1x128x128xf32> to vector<128x128xf32>
    %cst_48 = arith.constant dense<0.000000e+00> : vector<8x128xf32>
    %88 = tpu.matmul %83, %87, %cst_48 {dimension_numbers = #tpu.dot_dimension_numbers<[1], [0], [0], [1], [0, 0, 1, 1], [], []>} : vector<8x128xf32>, vector<128x128xf32>, vector<8x128xf32> -> vector<8x128xf32>
    %c1_49 = arith.constant 1 : index
    %c0_50 = arith.constant 0 : index
    %c0_51 = arith.constant 0 : index
    %89 = vector.load %arg6[%c1_49, %c0_50, %c0_51] : memref<2x1x128xf32, #tpu.memory_space<vmem>>, vector<1x1x128xf32>
    %90 = vector.shape_cast %89 : vector<1x1x128xf32> to vector<1x128xf32>
    %91 = vector.broadcast %90 : vector<1x128xf32> to vector<8x128xf32>
    %92 = arith.addf %88, %91 : vector<8x128xf32>
    %cst_52 = arith.constant 0.000000e+00 : f32
    %93 = vector.broadcast %cst_52 : f32 to vector<8x128xf32>
    %94 = arith.maximumf %92, %93 : vector<8x128xf32>
    %c1_53 = arith.constant 1 : index
    %c0_54 = arith.constant 0 : index
    %c0_55 = arith.constant 0 : index
    %95 = vector.load %arg7[%c1_53, %c0_54, %c0_55] : memref<2x128x128xf32, #tpu.memory_space<vmem>>, vector<1x128x128xf32>
    %96 = vector.shape_cast %95 : vector<1x128x128xf32> to vector<128x128xf32>
    %cst_56 = arith.constant dense<0.000000e+00> : vector<8x128xf32>
    %97 = tpu.matmul %94, %96, %cst_56 {dimension_numbers = #tpu.dot_dimension_numbers<[1], [0], [0], [1], [0, 0, 1, 1], [], []>} : vector<8x128xf32>, vector<128x128xf32>, vector<8x128xf32> -> vector<8x128xf32>
    %98 = vector.broadcast %85 : vector<1x128xf32> to vector<8x128xf32>
    %99 = arith.addf %98, %97 : vector<8x128xf32>
    %100 = arith.addf %55, %99 : vector<8x128xf32>
    %c0_57 = arith.constant 0 : index
    %c0_58 = arith.constant 0 : index
    %101 = vector.load %arg1[%c0_57, %c0_58] : memref<8x128xf32, #tpu.memory_space<vmem>>, vector<8x128xf32>
    %102 = vector.broadcast %10 : vector<8x1xf32> to vector<8x128xf32>
    %103 = arith.mulf %102, %100 : vector<8x128xf32>
    %cst_59 = arith.constant 1.000000e+00 : f32
    %104 = vector.broadcast %cst_59 : f32 to vector<8x1xf32>
    %105 = arith.subf %104, %10 : vector<8x1xf32>
    %106 = vector.broadcast %105 : vector<8x1xf32> to vector<8x128xf32>
    %107 = arith.mulf %106, %101 : vector<8x128xf32>
    %108 = arith.addf %103, %107 : vector<8x128xf32>
    %c0_60 = arith.constant 0 : index
    %c0_61 = arith.constant 0 : index
    %109 = vector.load %arg9[%c0_60, %c0_61] : memref<8x128xf32, #tpu.memory_space<vmem>>, vector<8x128xf32>
    tpu.vector_store %arg9[%c0_60, %c0_61], %108 {strides = array<i32>} : memref<8x128xf32, #tpu.memory_space<vmem>>, vector<8x128xf32>,
    return
  }
  func.func @transform_0(%arg0: i32) -> (i32, i32) {
    %c0_i32 = arith.constant 0 : i32
    %c0_i32_0 = arith.constant 0 : i32
    return %arg0, %c0_i32 : i32, i32
  }
  func.func @transform_1(%arg0: i32) -> (i32, i32) {
    %c0_i32 = arith.constant 0 : i32
    %c0_i32_0 = arith.constant 0 : i32
    %c0_i32_1 = arith.constant 0 : i32
    return %c0_i32, %c0_i32_0 : i32, i32
  }
  func.func @transform_2(%arg0: i32) -> (i32, i32, i32) {
    %c0_i32 = arith.constant 0 : i32
    %c0_i32_0 = arith.constant 0 : i32
    %c0_i32_1 = arith.constant 0 : i32
    %c0_i32_2 = arith.constant 0 : i32
    return %c0_i32, %c0_i32_0, %c0_i32_1 : i32, i32, i32
  }
  func.func @transform_3(%arg0: i32) -> (i32, i32, i32) {
    %c0_i32 = arith.constant 0 : i32
    %c0_i32_0 = arith.constant 0 : i32
    %c0_i32_1 = arith.constant 0 : i32
    %c0_i32_2 = arith.constant 0 : i32
    return %c0_i32, %c0_i32_0, %c0_i32_1 : i32, i32, i32
  }
  func.func @transform_4(%arg0: i32) -> (i32, i32, i32) {
    %c0_i32 = arith.constant 0 : i32
    %c0_i32_0 = arith.constant 0 : i32
    %c0_i32_1 = arith.constant 0 : i32
    %c0_i32_2 = arith.constant 0 : i32
    return %c0_i32, %c0_i32_0, %c0_i32_1 : i32, i32, i32
  }
  func.func @transform_5(%arg0: i32) -> (i32, i32, i32) {
    %c0_i32 = arith.constant 0 : i32
    %c0_i32_0 = arith.constant 0 : i32
    %c0_i32_1 = arith.constant 0 : i32
    %c0_i32_2 = arith.constant 0 : i32
    return %c0_i32, %c0_i32_0, %c0_i32_1 : i32, i32, i32
  }
  func.func @transform_6(%arg0: i32) -> (i32, i32, i32) {
    %c0_i32 = arith.constant 0 : i32
    %c0_i32_0 = arith.constant 0 : i32
    %c0_i32_1 = arith.constant 0 : i32
    %c0_i32_2 = arith.constant 0 : i32
    return %c0_i32, %c0_i32_0, %c0_i32_1 : i32, i32, i32
  }
  func.func @transform_7(%arg0: i32) -> (i32, i32, i32) {
    %c0_i32 = arith.constant 0 : i32
    %c0_i32_0 = arith.constant 0 : i32
    %c0_i32_1 = arith.constant 0 : i32
    %c0_i32_2 = arith.constant 0 : i32
    return %c0_i32, %c0_i32_0, %c0_i32_1 : i32, i32, i32
  }
  func.func @transform_8(%arg0: i32) -> (i32, i32) {
    %c0_i32 = arith.constant 0 : i32
    %c0_i32_0 = arith.constant 0 : i32
    return %arg0, %c0_i32 : i32, i32
  }
}

</mosaic_0001>

<llo_original>
// kernel: tpu_custom_call.1
$region0: #{tpu_custom_call.1}
  #allocation0 [shape = 'u32[]', space=smem, size = 0x4, offset = 0x4, fixed_abs, tag = 'smem constant byte address 0x4 - core index']
  #allocation1 [shape = 'u32[144,128]{1,0:T(1,128)}', space=vmem, size = 0x12000, scoped, tag = 'internal scratch']
  %s0 = inlined_call_operand.hbm [shape: f32[16,128], index: 0, kind: input, shape index: {}]
  %s1 = inlined_call_operand.vmem [shape: f32[1,128], index: 1, kind: input, shape index: {}]
  %s2 = inlined_call_operand.vmem [shape: f32[2,1,128], index: 2, kind: input, shape index: {}]
  %s3 = inlined_call_operand.vmem [shape: f32[2,1,128], index: 3, kind: input, shape index: {}]
  %s4 = inlined_call_operand.hbm [shape: f32[2,128,128], index: 4, kind: input, shape index: {}]
  %s5 = inlined_call_operand.vmem [shape: f32[2,1,128], index: 5, kind: input, shape index: {}]
  %s6 = inlined_call_operand.hbm [shape: f32[2,128,128], index: 6, kind: input, shape index: {}]
  %s7 = inlined_call_operand.vmem [shape: f32[2,1,128], index: 7, kind: input, shape index: {}]
  %s8 = inlined_call_operand.hbm [shape: f32[16,128], index: 8, kind: output, shape index: {}]
  %s9 = sld [smem:[#allocation0]]
  $region77: #{tpu_custom_call.1} parent=0
    _
  %s11 = ssub.s32 1, %s9
  %s12 = scalar_select 0, %s11, %s9
  $region1: #{tpu_custom_call.1} parent=0
    #allocation2 [shape = 'u8[8192]{0}', space=vmem, size = 0x2000, scoped, tag = 'input window, operand 0']
    #allocation3 [shape = 's32[2]{0}', space=sflag, size = 0x8, scoped, tag = 'scoped memory for tpu_custom_call.1']
    #allocation4 [shape = 's32[2]{0}', space=sflag, size = 0x8, scoped, tag = 'scoped memory for tpu_custom_call.1']
    #allocation5 [shape = 'u8[131072]{0}', space=vmem, size = 0x20000, scoped, tag = 'input window, operand 4, single buffered']
    #allocation6 [shape = 's32[1]{0}', space=sflag, size = 0x4, scoped, tag = 'scoped memory for tpu_custom_call.1']
    #allocation7 [shape = 'u8[131072]{0}', space=vmem, size = 0x20000, scoped, tag = 'input window, operand 6, single buffered']
    #allocation8 [shape = 'u8[8192]{0}', space=vmem, size = 0x2000, scoped, tag = 'output window, operand 0']
    %13 = vsyncpa [#allocation3], 0
    %s14 = scalar_lea.sflag [#allocation3], 1
    %15 = vsyncpa %s14, 0
    %16 = vsyncpa [#allocation6], 0
    %17 = vsyncpa [#allocation4], 0
    %s18 = scalar_lea.sflag [#allocation4], 1
    %19 = vsyncpa %s18, 0
    loop: start=0, step=1, limit=4
    $region2: #{tpu_custom_call.1} parent=1 // loop_pre_header
      _
    $region3: #{tpu_custom_call.1} parent=1 // loop_header
      %s21 = sphi 0, %s25
      %p22 = scmp.ge.s32.totalorder %s21, 4
      %s31 = sphi 0, %s33
      %s34 = sphi 0, %s31
      %s35 = sphi 0, %s34
      %s51 = sphi 0, %s35
      %s55 = sphi 0, %s55
      %s57 = sphi 0, %s55
      %s58 = sphi 0, %s57
      %s72 = sphi 0, %s58
      %s76 = sphi 0, %s76
      %s78 = sphi 0, %s76
      %s79 = sphi 0, %s78
      %s93 = sphi 0, %s79
      %s97 = sphi 0, %s97
      %s99 = sphi 0, %s97
      %s100 = sphi 0, %s99
      %s114 = sphi 0, %s100
      %s118 = sphi 0, %s118
      %s120 = sphi 0, %s118
      %s121 = sphi 0, %s120
      %s135 = sphi 0, %s121
      %s139 = sphi 0, %s139
      %s141 = sphi 0, %s139
      %s142 = sphi 0, %s141
      %s156 = sphi 0, %s142
      %s160 = sphi 0, %s160
      %s162 = sphi 0, %s160
      %s163 = sphi 0, %s162
      %s177 = sphi 0, %s163
      %s181 = sphi 0, %s181
      %s183 = sphi 0, %s181
      %s184 = sphi 0, %s183
      %s198 = sphi 0, %s184
      %s204 = sphi 0, %s206
      %s207 = sphi 0, %s204
      %s208 = sphi 0, %s207
      %s224 = sphi 0, %s208
    $region4: #{tpu_custom_call.1} parent=1 // loop_header_branch
      %24 = sbr.rel (%p22) target = $region8
    $region5: #{tpu_custom_call.1} parent=1 // loop_body
      %s26 = ssub.s32 %s21, 1
      %s27 = ssub.s32 %s21, 2
      %s28 = sadd.s32 %s21, 1
      %s29 = ssub.s32 %s21, %s28
      %p30 = scmp.eq.s32.totalorder %s29, 0
      %s32 = sadd.s32 %s31, 1
      %s33 = scalar_select %p30, %s31, %s32
      %p36 = pneg %p30
      %p37 = scmp.eq.s32.totalorder %s21, 1
      %p38 = por %p36, %p37
      %p39 = scmp.ne.s32.totalorder %s31, %s34
      %p40 = scmp.eq.s32.totalorder %s21, 0
      %p41 = por %p39, %p40
      %p42 = scmp.ne.s32.totalorder %s31, %s34
      %p43 = scmp.eq.s32.totalorder %s26, 1
      %p44 = por %p42, %p43
      %p45 = scmp.ne.s32.totalorder %s34, %s35
      %p46 = scmp.eq.s32.totalorder %s26, 0
      %p47 = por %p45, %p46
      %p48 = scmp.ne.s32.totalorder %s34, %s35
      %p49 = scmp.eq.s32.totalorder %s27, 1
      %p50 = por %p48, %p49
      %p52 = scmp.ne.s32.totalorder %s35, %s51
      %p53 = scmp.eq.s32.totalorder %s27, 0
      %p54 = por %p52, %p53
      %s56 = sadd.s32 %s55, 1
      %p59 = scmp.eq.s32.totalorder %s21, 1
      %p60 = scmp.ne.s32.totalorder %s55, %s57
      %p61 = scmp.eq.s32.totalorder %s21, 0
      %p62 = por %p60, %p61
      %p63 = scmp.ne.s32.totalorder %s55, %s57
      %p64 = scmp.eq.s32.totalorder %s26, 1
      %p65 = por %p63, %p64
      %p66 = scmp.ne.s32.totalorder %s57, %s58
      %p67 = scmp.eq.s32.totalorder %s26, 0
      %p68 = por %p66, %p67
      %p69 = scmp.ne.s32.totalorder %s57, %s58
      %p70 = scmp.eq.s32.totalorder %s27, 1
      %p71 = por %p69, %p70
      %p73 = scmp.ne.s32.totalorder %s58, %s72
      %p74 = scmp.eq.s32.totalorder %s27, 0
      %p75 = por %p73, %p74
      %s77 = sadd.s32 %s76, 1
      %p80 = scmp.eq.s32.totalorder %s21, 1
      %p81 = scmp.ne.s32.totalorder %s76, %s78
      %p82 = scmp.eq.s32.totalorder %s21, 0
      %p83 = por %p81, %p82
      %p84 = scmp.ne.s32.totalorder %s76, %s78
      %p85 = scmp.eq.s32.totalorder %s26, 1
      %p86 = por %p84, %p85
      %p87 = scmp.ne.s32.totalorder %s78, %s79
      %p88 = scmp.eq.s32.totalorder %s26, 0
      %p89 = por %p87, %p88
      %p90 = scmp.ne.s32.totalorder %s78, %s79
      %p91 = scmp.eq.s32.totalorder %s27, 1
      %p92 = por %p90, %p91
      %p94 = scmp.ne.s32.totalorder %s79, %s93
      %p95 = scmp.eq.s32.totalorder %s27, 0
      %p96 = por %p94, %p95
      %s98 = sadd.s32 %s97, 1
      %p101 = scmp.eq.s32.totalorder %s21, 1
      %p102 = scmp.ne.s32.totalorder %s97, %s99
      %p103 = scmp.eq.s32.totalorder %s21, 0
      %p104 = por %p102, %p103
      %p105 = scmp.ne.s32.totalorder %s97, %s99
      %p106 = scmp.eq.s32.totalorder %s26, 1
      %p107 = por %p105, %p106
      %p108 = scmp.ne.s32.totalorder %s99, %s100
      %p109 = scmp.eq.s32.totalorder %s26, 0
      %p110 = por %p108, %p109
      %p111 = scmp.ne.s32.totalorder %s99, %s100
      %p112 = scmp.eq.s32.totalorder %s27, 1
      %p113 = por %p111, %p112
      %p115 = scmp.ne.s32.totalorder %s100, %s114
      %p116 = scmp.eq.s32.totalorder %s27, 0
      %p117 = por %p115, %p116
      %s119 = sadd.s32 %s118, 1
      %p122 = scmp.eq.s32.totalorder %s21, 1
      %p123 = scmp.ne.s32.totalorder %s118, %s120
      %p124 = scmp.eq.s32.totalorder %s21, 0
      %p125 = por %p123, %p124
      %p126 = scmp.ne.s32.totalorder %s118, %s120
      %p127 = scmp.eq.s32.totalorder %s26, 1
      %p128 = por %p126, %p127
      %p129 = scmp.ne.s32.totalorder %s120, %s121
      %p130 = scmp.eq.s32.totalorder %s26, 0
      %p131 = por %p129, %p130
      %p132 = scmp.ne.s32.totalorder %s120, %s121
      %p133 = scmp.eq.s32.totalorder %s27, 1
      %p134 = por %p132, %p133
      %p136 = scmp.ne.s32.totalorder %s121, %s135
      %p137 = scmp.eq.s32.totalorder %s27, 0
      %p138 = por %p136, %p137
      %s140 = sadd.s32 %s139, 1
      %p143 = scmp.eq.s32.totalorder %s21, 1
      %p144 = scmp.ne.s32.totalorder %s139, %s141
      %p145 = scmp.eq.s32.totalorder %s21, 0
      %p146 = por %p144, %p145
      %p147 = scmp.ne.s32.totalorder %s139, %s141
      %p148 = scmp.eq.s32.totalorder %s26, 1
      %p149 = por %p147, %p148
      %p150 = scmp.ne.s32.totalorder %s141, %s142
      %p151 = scmp.eq.s32.totalorder %s26, 0
      %p152 = por %p150, %p151
      %p153 = scmp.ne.s32.totalorder %s141, %s142
      %p154 = scmp.eq.s32.totalorder %s27, 1
      %p155 = por %p153, %p154
      %p157 = scmp.ne.s32.totalorder %s142, %s156
      %p158 = scmp.eq.s32.totalorder %s27, 0
      %p159 = por %p157, %p158
      %s161 = sadd.s32 %s160, 1
      %p164 = scmp.eq.s32.totalorder %s21, 1
      %p165 = scmp.ne.s32.totalorder %s160, %s162
      %p166 = scmp.eq.s32.totalorder %s21, 0
      %p167 = por %p165, %p166
      %p168 = scmp.ne.s32.totalorder %s160, %s162
      %p169 = scmp.eq.s32.totalorder %s26, 1
      %p170 = por %p168, %p169
      %p171 = scmp.ne.s32.totalorder %s162, %s163
      %p172 = scmp.eq.s32.totalorder %s26, 0
      %p173 = por %p171, %p172
      %p174 = scmp.ne.s32.totalorder %s162, %s163
      %p175 = scmp.eq.s32.totalorder %s27, 1
      %p176 = por %p174, %p175
      %p178 = scmp.ne.s32.totalorder %s163, %s177
      %p179 = scmp.eq.s32.totalorder %s27, 0
      %p180 = por %p178, %p179
      %s182 = sadd.s32 %s181, 1
      %p185 = scmp.eq.s32.totalorder %s21, 1
      %p186 = scmp.ne.s32.totalorder %s181, %s183
      %p187 = scmp.eq.s32.totalorder %s21, 0
      %p188 = por %p186, %p187
      %p189 = scmp.ne.s32.totalorder %s181, %s183
      %p190 = scmp.eq.s32.totalorder %s26, 1
      %p191 = por %p189, %p190
      %p192 = scmp.ne.s32.totalorder %s183, %s184
      %p193 = scmp.eq.s32.totalorder %s26, 0
      %p194 = por %p192, %p193
      %p195 = scmp.ne.s32.totalorder %s183, %s184
      %p196 = scmp.eq.s32.totalorder %s27, 1
      %p197 = por %p195, %p196
      %p199 = scmp.ne.s32.totalorder %s184, %s198
      %p200 = scmp.eq.s32.totalorder %s27, 0
      %p201 = por %p199, %p200
      %s202 = ssub.s32 %s21, %s28
      %p203 = scmp.eq.s32.totalorder %s202, 0
      %s205 = sadd.s32 %s204, 1
      %s206 = scalar_select %p203, %s204, %s205
      %p209 = pneg %p203
      %p210 = scmp.eq.s32.totalorder %s21, 1
      %p211 = por %p209, %p210
      %p212 = scmp.ne.s32.totalorder %s204, %s207
      %p213 = scmp.eq.s32.totalorder %s21, 0
      %p214 = por %p212, %p213
      %p215 = scmp.ne.s32.totalorder %s204, %s207
      %p216 = scmp.eq.s32.totalorder %s26, 1
      %p217 = por %p215, %p216
      %p218 = scmp.ne.s32.totalorder %s207, %s208
      %p219 = scmp.eq.s32.totalorder %s26, 0
      %p220 = por %p218, %p219
      %p221 = scmp.ne.s32.totalorder %s207, %s208
      %p222 = scmp.eq.s32.totalorder %s27, 1
      %p223 = por %p221, %p222
      %p225 = scmp.ne.s32.totalorder %s208, %s224
      %p226 = scmp.eq.s32.totalorder %s27, 0
      %p227 = por %p225, %p226
      %p228 = scmp.le.s32.totalorder 1, %s21
      %p229 = scmp.lt.s32.totalorder %s21, 3
      %p230 = pnand %p228, %p229
      %p231 = pneg %p230
      // Predicated region
      $region9: #{tpu_custom_call.1} parent=5 // pred_check
        _
      $region10: #{tpu_custom_call.1} parent=5 // pred_check_branch
        %233 = sbr.rel (%p230) target = $region12
      $region11: #{tpu_custom_call.1} parent=5 // pred_region
        %s234 = ssub.s32 %s21, 1
        // Predicated region
        $region13: #{tpu_custom_call.1} parent=11 // pred_check
          %p235 = pneg %p68
        $region14: #{tpu_custom_call.1} parent=11 // pred_check_branch
          %237 = sbr.rel (%p235) target = $region16
        $region15: #{tpu_custom_call.1} parent=11 // pred_region
          _
        $region16: #{tpu_custom_call.1} parent=11 // pred_fallthru
          _
        // Predicated region
        $region17: #{tpu_custom_call.1} parent=11 // pred_check
          %p238 = pneg %p89
        $region18: #{tpu_custom_call.1} parent=11 // pred_check_branch
          %240 = sbr.rel (%p238) target = $region20
        $region19: #{tpu_custom_call.1} parent=11 // pred_region
          _
        $region20: #{tpu_custom_call.1} parent=11 // pred_fallthru
          _
        // Predicated region
        $region21: #{tpu_custom_call.1} parent=11 // pred_check
          %p241 = pneg %p110
        $region22: #{tpu_custom_call.1} parent=11 // pred_check_branch
          %243 = sbr.rel (%p241) target = $region24
        $region23: #{tpu_custom_call.1} parent=11 // pred_region
          _
        $region24: #{tpu_custom_call.1} parent=11 // pred_fallthru
          _
        // Predicated region
        $region25: #{tpu_custom_call.1} parent=11 // pred_check
          %p244 = pneg %p131
        $region26: #{tpu_custom_call.1} parent=11 // pred_check_branch
          %246 = sbr.rel (%p244) target = $region28
        $region27: #{tpu_custom_call.1} parent=11 // pred_region
          %s248 = ssub.s32 4096, 4096
          %249 = vsyncadd [#allocation6], %s248
          %s250 = sshll.u32 [#allocation5], 4
          %s251 = int_to_ptr.vmem [resolvable:$true] %s250
          %256 = dma.hbm_to_vmem [thread:$0]  %s4, 4096, %s251, [#allocation6], 128, 128, 8
        $region28: #{tpu_custom_call.1} parent=11 // pred_fallthru
          _
        // Predicated region
        $region29: #{tpu_custom_call.1} parent=11 // pred_check
          %p257 = pneg %p152
        $region30: #{tpu_custom_call.1} parent=11 // pred_check_branch
          %259 = sbr.rel (%p257) target = $region32
        $region31: #{tpu_custom_call.1} parent=11 // pred_region
          _
        $region32: #{tpu_custom_call.1} parent=11 // pred_fallthru
          _
        // Predicated region
        $region33: #{tpu_custom_call.1} parent=11 // pred_check
          %p260 = pneg %p173
        $region34: #{tpu_custom_call.1} parent=11 // pred_check_branch
          %262 = sbr.rel (%p260) target = $region36
        $region35: #{tpu_custom_call.1} parent=11 // pred_region
          %s264 = ssub.s32 4096, 4096
          %265 = vsyncadd [#allocation6], %s264
          %s266 = sshll.u32 [#allocation7], 4
          %s267 = int_to_ptr.vmem [resolvable:$true] %s266
          %272 = dma.hbm_to_vmem [thread:$0]  %s6, 4096, %s267, [#allocation6], 128, 128, 8
        $region36: #{tpu_custom_call.1} parent=11 // pred_fallthru
          _
        // Predicated region
        $region37: #{tpu_custom_call.1} parent=11 // pred_check
          %p273 = pneg %p194
        $region38: #{tpu_custom_call.1} parent=11 // pred_check_branch
          %275 = sbr.rel (%p273) target = $region40
        $region39: #{tpu_custom_call.1} parent=11 // pred_region
          _
        $region40: #{tpu_custom_call.1} parent=11 // pred_fallthru
          _
      $region12: #{tpu_custom_call.1} parent=5 // pred_fallthru
        _
      %p276 = scmp.lt.s32.totalorder %s21, 2
      // Predicated region
      $region41: #{tpu_custom_call.1} parent=5 // pred_check
        %p277 = pneg %p276
      $region42: #{tpu_custom_call.1} parent=5 // pred_check_branch
        %279 = sbr.rel (%p277) target = $region44
      $region43: #{tpu_custom_call.1} parent=5 // pred_region
        // Predicated region
        $region45: #{tpu_custom_call.1} parent=43 // pred_check
          %p280 = pneg %p41
        $region46: #{tpu_custom_call.1} parent=43 // pred_check_branch
          %282 = sbr.rel (%p280) target = $region48
        $region47: #{tpu_custom_call.1} parent=43 // pred_region
          %s283 = sand.u32 %s31, 1
          %s284 = scalar_lea.sflag [#allocation3], %s283
          %s285 = sand.u32 %s31, 1
          %s286 = smul.addr %s285, 8
          %s287 = scalar_lea.vmem [#allocation2], %s286
          %s289 = ssub.s32 128, 128
          %290 = vsyncadd %s284, %s289
          %s291 = smul.addr %s21, 128
          %s292 = scalar_lea.hbm %s0, %s291
          %s294 = sshll.u32 %s287, 4
          %s295 = int_to_ptr.vmem [resolvable:$true] %s294
          %297 = dma.hbm_to_vmem [thread:$0]  %s292, 128, %s295, %s284
        $region48: #{tpu_custom_call.1} parent=43 // pred_fallthru
          _
      $region44: #{tpu_custom_call.1} parent=5 // pred_fallthru
        _
      %p298 = scmp.le.s32.totalorder 1, %s21
      %p299 = scmp.lt.s32.totalorder %s21, 3
      %p300 = pnand %p298, %p299
      %p301 = pneg %p300
      // Predicated region
      $region49: #{tpu_custom_call.1} parent=5 // pred_check
        _
      $region50: #{tpu_custom_call.1} parent=5 // pred_check_branch
        %303 = sbr.rel (%p300) target = $region52
      $region51: #{tpu_custom_call.1} parent=5 // pred_region
        %s304 = ssub.s32 %s21, 1
        %s305 = sand.u32 %s34, 1
        %s306 = scalar_lea.sflag [#allocation3], %s305
        %s307 = sand.u32 %s34, 1
        %s308 = smul.addr %s307, 8
        %s309 = scalar_lea.vmem [#allocation2], %s308
        // Predicated region
        $region53: #{tpu_custom_call.1} parent=51 // pred_check
          %p310 = pneg %p47
        $region54: #{tpu_custom_call.1} parent=51 // pred_check_branch
          %312 = sbr.rel (%p310) target = $region56
        $region55: #{tpu_custom_call.1} parent=51 // pred_region
          %313 = dma.done %s306, 128
        $region56: #{tpu_custom_call.1} parent=51 // pred_fallthru
          _
        // Predicated region
        $region57: #{tpu_custom_call.1} parent=51 // pred_check
          %p314 = pneg %p131
        $region58: #{tpu_custom_call.1} parent=51 // pred_check_branch
          %316 = sbr.rel (%p314) target = $region60
        $region59: #{tpu_custom_call.1} parent=51 // pred_region
          %317 = dma.done [#allocation6], 4096
        $region60: #{tpu_custom_call.1} parent=51 // pred_fallthru
          _
        // Predicated region
        $region61: #{tpu_custom_call.1} parent=51 // pred_check
          %p318 = pneg %p173
        $region62: #{tpu_custom_call.1} parent=51 // pred_check_branch
          %320 = sbr.rel (%p318) target = $region64
        $region63: #{tpu_custom_call.1} parent=51 // pred_region
          %321 = dma.done [#allocation6], 4096
        $region64: #{tpu_custom_call.1} parent=51 // pred_fallthru
          _
        %s322 = sand.u32 %s34, 1
        %s323 = scalar_lea.sflag [#allocation3], %s322
        %s324 = sand.u32 %s34, 1
        %s325 = smul.addr %s324, 8
        %s326 = scalar_lea.vmem [#allocation2], %s325
        %p327 = pneg %p47
        %p328 = pneg %p44
        %p329 = pneg %p68
        %p330 = pneg %p65
        %p331 = pneg %p89
        %p332 = pneg %p86
        %p333 = pneg %p110
        %p334 = pneg %p107
        %p335 = pneg %p131
        %p336 = pneg %p128
        %p337 = pneg %p152
        %p338 = pneg %p149
        %p339 = pneg %p173
        %p340 = pneg %p170
        %p341 = pneg %p194
        %p342 = pneg %p191
        %p343 = pneg %p220
        %p344 = pneg %p217
        %s345 = sand.u32 %s207, 1
        %s346 = scalar_lea.sflag [#allocation4], %s345
        %s347 = sand.u32 %s207, 1
        %s348 = smul.addr %s347, 8
        %s349 = scalar_lea.vmem [#allocation8], %s348
        %v350 = vld [vmem:[%s309] sm:$0xff]
        %v351 = vld [vmem:[%s1] sm:$0x1]
        %v353 = vlaneseq
        %v354 = vshrl.u32 %v353, 7
        %v355 = vsub.s32 0, %v354
        %v356 = vrot.slane %v351, %v355
        %v358 = vmul.f32 %v350, %v356
        %359 = vadd.xlane.f32.xlu0 %v358
        %v360 = vpop.xlane.xlu0 %359
        %v361 = vxor.u32 %v360, 2147483648
        %v362 = vmul.f32 %v361, 1.442695
        %v363 = vpow.pop %v362
        %v364 = vadd.f32 %v363, 1.0
        %v365 = vrcp.pop %v364
        %v366 = vmul.f32 1.0, %v365
        %v367 = vld [vmem:[%s2] sm:$0x1]
        %v368 = vld [vmem:[%s3] sm:$0x1]
        %369 = vadd.xlane.f32.xlu0 %v350
        %v370 = vpop.xlane.xlu0 %369
        %v371 = vmul.f32 %v370, 0.03125
        %v372 = vmul.f32 %v350, %v350
        %373 = vadd.xlane.f32.xlu0 %v372
        %v374 = vpop.xlane.xlu0 %373
        %v375 = vmul.f32 %v374, 0.03125
        %v376 = vmul.f32 %v371, %v371
        %v377 = vsub.f32 %v375, %v376
        %v378 = vmax.f32 %v377, 0.0
        %v379 = vsub.f32 %v350, %v371
        %v380 = vadd.f32 %v378, 1e-05
        %v381 = vrsqrt.pop %v380
        %v382 = vmul.f32 %v379, %v381
        %v384 = vlaneseq
        %v385 = vshrl.u32 %v384, 7
        %v386 = vsub.s32 0, %v385
        %v387 = vrot.slane %v367, %v386
        %v389 = vmul.f32 %v382, %v387
        %v391 = vlaneseq
        %v392 = vshrl.u32 %v391, 7
        %v393 = vsub.s32 0, %v392
        %v394 = vrot.slane %v368, %v393
        %v396 = vadd.f32 %v389, %v394
        %v397 = vld [vmem:[%s7] sm:$0x1]
        %v398 = vld [vmem:[#allocation5] sm:$0xff]
        %v399 = vld [vmem:[#allocation5 + $0x8] sm:$0xff]
        %v400 = vld [vmem:[#allocation5 + $0x10] sm:$0xff]
        %v401 = vld [vmem:[#allocation5 + $0x18] sm:$0xff]
        %v402 = vld [vmem:[#allocation5 + $0x20] sm:$0xff]
        %v403 = vld [vmem:[#allocation5 + $0x28] sm:$0xff]
        %v404 = vld [vmem:[#allocation5 + $0x30] sm:$0xff]
        %v405 = vld [vmem:[#allocation5 + $0x38] sm:$0xff]
        %v406 = vld [vmem:[#allocation5 + $0x40] sm:$0xff]
        %v407 = vld [vmem:[#allocation5 + $0x48] sm:$0xff]
        %v408 = vld [vmem:[#allocation5 + $0x50] sm:$0xff]
        %v409 = vld [vmem:[#allocation5 + $0x58] sm:$0xff]
        %v410 = vld [vmem:[#allocation5 + $0x60] sm:$0xff]
        %v411 = vld [vmem:[#allocation5 + $0x68] sm:$0xff]
        %v412 = vld [vmem:[#allocation5 + $0x70] sm:$0xff]
        %v413 = vld [vmem:[#allocation5 + $0x78] sm:$0xff]
        %v414 = vld [vmem:[%s5] sm:$0x1]
        %v416 = vlaneseq
        %v417 = vshrl.u32 %v416, 7
        %v418 = vsub.s32 0, %v417
        %v419 = vrot.slane %v414, %v418
        %421 = vmatprep.subr.mxu0 0.0
        %422 = vmatpush1.msra.mxu0 %v398
        %423 = vmatprep.subr.mxu0 0.0
        %424 = vmatpush1.msra.mxu0 %v399
        %425 = vmatprep.subr.mxu0 0.0
        %426 = vmatpush1.msra.mxu0 %v400
        %427 = vmatprep.subr.mxu0 0.0
        %428 = vmatpush1.msra.mxu0 %v401
        %429 = vmatprep.subr.mxu0 0.0
        %430 = vmatpush1.msra.mxu0 %v402
        %431 = vmatprep.subr.mxu0 0.0
        %432 = vmatpush1.msra.mxu0 %v403
        %433 = vmatprep.subr.mxu0 0.0
        %434 = vmatpush1.msra.mxu0 %v404
        %435 = vmatprep.subr.mxu0 0.0
        %436 = vmatpush1.msra.mxu0 %v405
        %437 = vmatprep.subr.mxu0 0.0
        %438 = vmatpush1.msra.mxu0 %v406
        %439 = vmatprep.subr.mxu0 0.0
        %440 = vmatpush1.msra.mxu0 %v407
        %441 = vmatprep.subr.mxu0 0.0
        %442 = vmatpush1.msra.mxu0 %v408
        %443 = vmatprep.subr.mxu0 0.0
        %444 = vmatpush1.msra.mxu0 %v409
        %445 = vmatprep.subr.mxu0 0.0
        %446 = vmatpush1.msra.mxu0 %v410
        %447 = vmatprep.subr.mxu0 0.0
        %448 = vmatpush1.msra.mxu0 %v411
        %449 = vmatprep.subr.mxu0 0.0
        %450 = vmatpush1.msra.mxu0 %v412
        %451 = vmatprep.subr.mxu0 0.0
        %452 = vmatpush1.msra.mxu0 %v413
        %453 = vmatprep.subr.mxu0 0.0
        %454 = vmatpush1.msra.mxu0 0.0
        %455 = vmatprep.subr.mxu0 0.0
        %456 = vmatpush1.msra.mxu0 0.0
        %457 = vmatprep.subr.mxu0 0.0
        %458 = vmatpush1.msra.mxu0 0.0
        %459 = vmatprep.subr.mxu0 0.0
        %460 = vmatpush1.msra.mxu0 0.0
        %461 = vmatprep.subr.mxu0 0.0
        %462 = vmatpush1.msra.mxu0 0.0
        %463 = vmatprep.subr.mxu0 0.0
        %464 = vmatpush1.msra.mxu0 0.0
        %465 = vmatprep.subr.mxu0 0.0
        %466 = vmatpush1.msra.mxu0 0.0
        %467 = vmatprep.subr.mxu0 0.0
        %468 = vmatpush1.msra.mxu0 0.0
        %469 = vmatprep.subr.mxu0 0.0
        %470 = vmatpush1.msra.mxu0 0.0
        %471 = vmatprep.subr.mxu0 0.0
        %472 = vmatpush1.msra.mxu0 0.0
        %473 = vmatprep.subr.mxu0 0.0
        %474 = vmatpush1.msra.mxu0 0.0
        %475 = vmatprep.subr.mxu0 0.0
        %476 = vmatpush1.msra.mxu0 0.0
        %477 = vmatprep.subr.mxu0 0.0
        %478 = vmatpush1.msra.mxu0 0.0
        %479 = vmatprep.subr.mxu0 0.0
        %480 = vmatpush1.msra.mxu0 0.0
        %481 = vmatprep.subr.mxu0 0.0
        %482 = vmatpush1.msra.mxu0 0.0
        %483 = vmatprep.subr.mxu0 0.0
        %484 = vmatpush1.msra.mxu0 0.0
        %485 = vmatprep.mubr.f32.mxu0 0.0
        %486 = vmatmul.mubr.f32.gmra.mrb[0].mxu0 %v396
        %v487 = vpop.f32.mrb[0].mxu0
        %v488 = vadd.f32 %v419, %v487
        %v489 = vpop.f32.mrb[0].mxu0
        %490 = vdwg.mxu0
        %v491 = vmax.f32 %v488, 0.0
        %v492 = vld [vmem:[#allocation7] sm:$0xff]
        %v493 = vld [vmem:[#allocation7 + $0x8] sm:$0xff]
        %v494 = vld [vmem:[#allocation7 + $0x10] sm:$0xff]
        %v495 = vld [vmem:[#allocation7 + $0x18] sm:$0xff]
        %v496 = vld [vmem:[#allocation7 + $0x20] sm:$0xff]
        %v497 = vld [vmem:[#allocation7 + $0x28] sm:$0xff]
        %v498 = vld [vmem:[#allocation7 + $0x30] sm:$0xff]
        %v499 = vld [vmem:[#allocation7 + $0x38] sm:$0xff]
        %v500 = vld [vmem:[#allocation7 + $0x40] sm:$0xff]
        %v501 = vld [vmem:[#allocation7 + $0x48] sm:$0xff]
        %v502 = vld [vmem:[#allocation7 + $0x50] sm:$0xff]
        %v503 = vld [vmem:[#allocation7 + $0x58] sm:$0xff]
        %v504 = vld [vmem:[#allocation7 + $0x60] sm:$0xff]
        %v505 = vld [vmem:[#allocation7 + $0x68] sm:$0xff]
        %v506 = vld [vmem:[#allocation7 + $0x70] sm:$0xff]
        %v507 = vld [vmem:[#allocation7 + $0x78] sm:$0xff]
        %508 = vmatprep.subr.mxu0 0.0
        %509 = vmatpush1.msra.mxu0 %v492
        %510 = vmatprep.subr.mxu0 0.0
        %511 = vmatpush1.msra.mxu0 %v493
        %512 = vmatprep.subr.mxu0 0.0
        %513 = vmatpush1.msra.mxu0 %v494
        %514 = vmatprep.subr.mxu0 0.0
        %515 = vmatpush1.msra.mxu0 %v495
        %516 = vmatprep.subr.mxu0 0.0
        %517 = vmatpush1.msra.mxu0 %v496
        %518 = vmatprep.subr.mxu0 0.0
        %519 = vmatpush1.msra.mxu0 %v497
        %520 = vmatprep.subr.mxu0 0.0
        %521 = vmatpush1.msra.mxu0 %v498
        %522 = vmatprep.subr.mxu0 0.0
        %523 = vmatpush1.msra.mxu0 %v499
        %524 = vmatprep.subr.mxu0 0.0
        %525 = vmatpush1.msra.mxu0 %v500
        %526 = vmatprep.subr.mxu0 0.0
        %527 = vmatpush1.msra.mxu0 %v501
        %528 = vmatprep.subr.mxu0 0.0
        %529 = vmatpush1.msra.mxu0 %v502
        %530 = vmatprep.subr.mxu0 0.0
        %531 = vmatpush1.msra.mxu0 %v503
        %532 = vmatprep.subr.mxu0 0.0
        %533 = vmatpush1.msra.mxu0 %v504
        %534 = vmatprep.subr.mxu0 0.0
        %535 = vmatpush1.msra.mxu0 %v505
        %536 = vmatprep.subr.mxu0 0.0
        %537 = vmatpush1.msra.mxu0 %v506
        %538 = vmatprep.subr.mxu0 0.0
        %539 = vmatpush1.msra.mxu0 %v507
        %540 = vmatprep.subr.mxu0 0.0
        %541 = vmatpush1.msra.mxu0 0.0
        %542 = vmatprep.subr.mxu0 0.0
        %543 = vmatpush1.msra.mxu0 0.0
        %544 = vmatprep.subr.mxu0 0.0
        %545 = vmatpush1.msra.mxu0 0.0
        %546 = vmatprep.subr.mxu0 0.0
        %547 = vmatpush1.msra.mxu0 0.0
        %548 = vmatprep.subr.mxu0 0.0
        %549 = vmatpush1.msra.mxu0 0.0
        %550 = vmatprep.subr.mxu0 0.0
        %551 = vmatpush1.msra.mxu0 0.0
        %552 = vmatprep.subr.mxu0 0.0
        %553 = vmatpush1.msra.mxu0 0.0
        %554 = vmatprep.subr.mxu0 0.0
        %555 = vmatpush1.msra.mxu0 0.0
        %556 = vmatprep.subr.mxu0 0.0
        %557 = vmatpush1.msra.mxu0 0.0
        %558 = vmatprep.subr.mxu0 0.0
        %559 = vmatpush1.msra.mxu0 0.0
        %560 = vmatprep.subr.mxu0 0.0
        %561 = vmatpush1.msra.mxu0 0.0
        %562 = vmatprep.subr.mxu0 0.0
        %563 = vmatpush1.msra.mxu0 0.0
        %564 = vmatprep.subr.mxu0 0.0
        %565 = vmatpush1.msra.mxu0 0.0
        %566 = vmatprep.subr.mxu0 0.0
        %567 = vmatpush1.msra.mxu0 0.0
        %568 = vmatprep.subr.mxu0 0.0
        %569 = vmatpush1.msra.mxu0 0.0
        %570 = vmatprep.subr.mxu0 0.0
        %571 = vmatpush1.msra.mxu0 0.0
        %572 = vmatprep.mubr.f32.mxu0 0.0
        %573 = vmatmul.mubr.f32.gmra.mrb[0].mxu0 %v491
        %v574 = vpop.f32.mrb[0].mxu0
        %v575 = vadd.f32 0.0, %v574
        %v576 = vpop.f32.mrb[0].mxu0
        %577 = vdwg.mxu0
        %v579 = vlaneseq
        %v580 = vshrl.u32 %v579, 7
        %v581 = vsub.s32 0, %v580
        %v582 = vrot.slane %v397, %v581
        %v584 = vadd.f32 %v582, %v575
        %v585 = vadd.f32 %v350, %v584
        %s586 = scalar_lea.vmem %s2, 1
        %v587 = vld [vmem:[%s586] sm:$0x1]
        %s588 = scalar_lea.vmem %s3, 1
        %v589 = vld [vmem:[%s588] sm:$0x1]
        %590 = vadd.xlane.f32.xlu0 %v585
        %v591 = vpop.xlane.xlu0 %590
        %v592 = vmul.f32 %v591, 0.03125
        %v593 = vmul.f32 %v585, %v585
        %594 = vadd.xlane.f32.xlu0 %v593
        %v595 = vpop.xlane.xlu0 %594
        %v596 = vmul.f32 %v595, 0.03125
        %v597 = vmul.f32 %v592, %v592
        %v598 = vsub.f32 %v596, %v597
        %v599 = vmax.f32 %v598, 0.0
        %v600 = vsub.f32 %v585, %v592
        %v601 = vadd.f32 %v599, 1e-05
        %v602 = vrsqrt.pop %v601
        %v603 = vmul.f32 %v600, %v602
        %v605 = vlaneseq
        %v606 = vshrl.u32 %v605, 7
        %v607 = vsub.s32 0, %v606
        %v608 = vrot.slane %v587, %v607
        %v610 = vmul.f32 %v603, %v608
        %v612 = vlaneseq
        %v613 = vshrl.u32 %v612, 7
        %v614 = vsub.s32 0, %v613
        %v615 = vrot.slane %v589, %v614
        %v617 = vadd.f32 %v610, %v615
        %s618 = scalar_lea.vmem %s7, 1
        %v619 = vld [vmem:[%s618] sm:$0x1]
        %s620 = scalar_lea.vmem [#allocation5], 128
        %v621 = vld [vmem:[%s620] sm:$0xff]
        %v622 = vld [vmem:[%s620 + $0x8] sm:$0xff]
        %v623 = vld [vmem:[%s620 + $0x10] sm:$0xff]
        %v624 = vld [vmem:[%s620 + $0x18] sm:$0xff]
        %v625 = vld [vmem:[%s620 + $0x20] sm:$0xff]
        %v626 = vld [vmem:[%s620 + $0x28] sm:$0xff]
        %v627 = vld [vmem:[%s620 + $0x30] sm:$0xff]
        %v628 = vld [vmem:[%s620 + $0x38] sm:$0xff]
        %v629 = vld [vmem:[%s620 + $0x40] sm:$0xff]
        %v630 = vld [vmem:[%s620 + $0x48] sm:$0xff]
        %v631 = vld [vmem:[%s620 + $0x50] sm:$0xff]
        %v632 = vld [vmem:[%s620 + $0x58] sm:$0xff]
        %v633 = vld [vmem:[%s620 + $0x60] sm:$0xff]
        %v634 = vld [vmem:[%s620 + $0x68] sm:$0xff]
        %v635 = vld [vmem:[%s620 + $0x70] sm:$0xff]
        %v636 = vld [vmem:[%s620 + $0x78] sm:$0xff]
        %s637 = scalar_lea.vmem %s5, 1
        %v638 = vld [vmem:[%s637] sm:$0x1]
        %v640 = vlaneseq
        %v641 = vshrl.u32 %v640, 7
        %v642 = vsub.s32 0, %v641
        %v643 = vrot.slane %v638, %v642
        %645 = vmatprep.subr.mxu0 0.0
        %646 = vmatpush1.msra.mxu0 %v621
        %647 = vmatprep.subr.mxu0 0.0
        %648 = vmatpush1.msra.mxu0 %v622
        %649 = vmatprep.subr.mxu0 0.0
        %650 = vmatpush1.msra.mxu0 %v623
        %651 = vmatprep.subr.mxu0 0.0
        %652 = vmatpush1.msra.mxu0 %v624
        %653 = vmatprep.subr.mxu0 0.0
        %654 = vmatpush1.msra.mxu0 %v625
        %655 = vmatprep.subr.mxu0 0.0
        %656 = vmatpush1.msra.mxu0 %v626
        %657 = vmatprep.subr.mxu0 0.0
        %658 = vmatpush1.msra.mxu0 %v627
        %659 = vmatprep.subr.mxu0 0.0
        %660 = vmatpush1.msra.mxu0 %v628
        %661 = vmatprep.subr.mxu0 0.0
        %662 = vmatpush1.msra.mxu0 %v629
        %663 = vmatprep.subr.mxu0 0.0
        %664 = vmatpush1.msra.mxu0 %v630
        %665 = vmatprep.subr.mxu0 0.0
        %666 = vmatpush1.msra.mxu0 %v631
        %667 = vmatprep.subr.mxu0 0.0
        %668 = vmatpush1.msra.mxu0 %v632
        %669 = vmatprep.subr.mxu0 0.0
        %670 = vmatpush1.msra.mxu0 %v633
        %671 = vmatprep.subr.mxu0 0.0
        %672 = vmatpush1.msra.mxu0 %v634
        %673 = vmatprep.subr.mxu0 0.0
        %674 = vmatpush1.msra.mxu0 %v635
        %675 = vmatprep.subr.mxu0 0.0
        %676 = vmatpush1.msra.mxu0 %v636
        %677 = vmatprep.subr.mxu0 0.0
        %678 = vmatpush1.msra.mxu0 0.0
        %679 = vmatprep.subr.mxu0 0.0
        %680 = vmatpush1.msra.mxu0 0.0
        %681 = vmatprep.subr.mxu0 0.0
        %682 = vmatpush1.msra.mxu0 0.0
        %683 = vmatprep.subr.mxu0 0.0
        %684 = vmatpush1.msra.mxu0 0.0
        %685 = vmatprep.subr.mxu0 0.0
        %686 = vmatpush1.msra.mxu0 0.0
        %687 = vmatprep.subr.mxu0 0.0
        %688 = vmatpush1.msra.mxu0 0.0
        %689 = vmatprep.subr.mxu0 0.0
        %690 = vmatpush1.msra.mxu0 0.0
        %691 = vmatprep.subr.mxu0 0.0
        %692 = vmatpush1.msra.mxu0 0.0
        %693 = vmatprep.subr.mxu0 0.0
        %694 = vmatpush1.msra.mxu0 0.0
        %695 = vmatprep.subr.mxu0 0.0
        %696 = vmatpush1.msra.mxu0 0.0
        %697 = vmatprep.subr.mxu0 0.0
        %698 = vmatpush1.msra.mxu0 0.0
        %699 = vmatprep.subr.mxu0 0.0
        %700 = vmatpush1.msra.mxu0 0.0
        %701 = vmatprep.subr.mxu0 0.0
        %702 = vmatpush1.msra.mxu0 0.0
        %703 = vmatprep.subr.mxu0 0.0
        %704 = vmatpush1.msra.mxu0 0.0
        %705 = vmatprep.subr.mxu0 0.0
        %706 = vmatpush1.msra.mxu0 0.0
        %707 = vmatprep.subr.mxu0 0.0
        %708 = vmatpush1.msra.mxu0 0.0
        %709 = vmatprep.mubr.f32.mxu0 0.0
        %710 = vmatmul.mubr.f32.gmra.mrb[0].mxu0 %v617
        %v711 = vpop.f32.mrb[0].mxu0
        %v712 = vadd.f32 %v643, %v711
        %v713 = vpop.f32.mrb[0].mxu0
        %714 = vdwg.mxu0
        %v715 = vmax.f32 %v712, 0.0
        %s716 = scalar_lea.vmem [#allocation7], 128
        %v717 = vld [vmem:[%s716] sm:$0xff]
        %v718 = vld [vmem:[%s716 + $0x8] sm:$0xff]
        %v719 = vld [vmem:[%s716 + $0x10] sm:$0xff]
        %v720 = vld [vmem:[%s716 + $0x18] sm:$0xff]
        %v721 = vld [vmem:[%s716 + $0x20] sm:$0xff]
        %v722 = vld [vmem:[%s716 + $0x28] sm:$0xff]
        %v723 = vld [vmem:[%s716 + $0x30] sm:$0xff]
        %v724 = vld [vmem:[%s716 + $0x38] sm:$0xff]
        %v725 = vld [vmem:[%s716 + $0x40] sm:$0xff]
        %v726 = vld [vmem:[%s716 + $0x48] sm:$0xff]
        %v727 = vld [vmem:[%s716 + $0x50] sm:$0xff]
        %v728 = vld [vmem:[%s716 + $0x58] sm:$0xff]
        %v729 = vld [vmem:[%s716 + $0x60] sm:$0xff]
        %v730 = vld [vmem:[%s716 + $0x68] sm:$0xff]
        %v731 = vld [vmem:[%s716 + $0x70] sm:$0xff]
        %v732 = vld [vmem:[%s716 + $0x78] sm:$0xff]
        %733 = vmatprep.subr.mxu0 0.0
        %734 = vmatpush1.msra.mxu0 %v717
        %735 = vmatprep.subr.mxu0 0.0
        %736 = vmatpush1.msra.mxu0 %v718
        %737 = vmatprep.subr.mxu0 0.0
        %738 = vmatpush1.msra.mxu0 %v719
        %739 = vmatprep.subr.mxu0 0.0
        %740 = vmatpush1.msra.mxu0 %v720
        %741 = vmatprep.subr.mxu0 0.0
        %742 = vmatpush1.msra.mxu0 %v721
        %743 = vmatprep.subr.mxu0 0.0
        %744 = vmatpush1.msra.mxu0 %v722
        %745 = vmatprep.subr.mxu0 0.0
        %746 = vmatpush1.msra.mxu0 %v723
        %747 = vmatprep.subr.mxu0 0.0
        %748 = vmatpush1.msra.mxu0 %v724
        %749 = vmatprep.subr.mxu0 0.0
        %750 = vmatpush1.msra.mxu0 %v725
        %751 = vmatprep.subr.mxu0 0.0
        %752 = vmatpush1.msra.mxu0 %v726
        %753 = vmatprep.subr.mxu0 0.0
        %754 = vmatpush1.msra.mxu0 %v727
        %755 = vmatprep.subr.mxu0 0.0
        %756 = vmatpush1.msra.mxu0 %v728
        %757 = vmatprep.subr.mxu0 0.0
        %758 = vmatpush1.msra.mxu0 %v729
        %759 = vmatprep.subr.mxu0 0.0
        %760 = vmatpush1.msra.mxu0 %v730
        %761 = vmatprep.subr.mxu0 0.0
        %762 = vmatpush1.msra.mxu0 %v731
        %763 = vmatprep.subr.mxu0 0.0
        %764 = vmatpush1.msra.mxu0 %v732
        %765 = vmatprep.subr.mxu0 0.0
        %766 = vmatpush1.msra.mxu0 0.0
        %767 = vmatprep.subr.mxu0 0.0
        %768 = vmatpush1.msra.mxu0 0.0
        %769 = vmatprep.subr.mxu0 0.0
        %770 = vmatpush1.msra.mxu0 0.0
        %771 = vmatprep.subr.mxu0 0.0
        %772 = vmatpush1.msra.mxu0 0.0
        %773 = vmatprep.subr.mxu0 0.0
        %774 = vmatpush1.msra.mxu0 0.0
        %775 = vmatprep.subr.mxu0 0.0
        %776 = vmatpush1.msra.mxu0 0.0
        %777 = vmatprep.subr.mxu0 0.0
        %778 = vmatpush1.msra.mxu0 0.0
        %779 = vmatprep.subr.mxu0 0.0
        %780 = vmatpush1.msra.mxu0 0.0
        %781 = vmatprep.subr.mxu0 0.0
        %782 = vmatpush1.msra.mxu0 0.0
        %783 = vmatprep.subr.mxu0 0.0
        %784 = vmatpush1.msra.mxu0 0.0
        %785 = vmatprep.subr.mxu0 0.0
        %786 = vmatpush1.msra.mxu0 0.0
        %787 = vmatprep.subr.mxu0 0.0
        %788 = vmatpush1.msra.mxu0 0.0
        %789 = vmatprep.subr.mxu0 0.0
        %790 = vmatpush1.msra.mxu0 0.0
        %791 = vmatprep.subr.mxu0 0.0
        %792 = vmatpush1.msra.mxu0 0.0
        %793 = vmatprep.subr.mxu0 0.0
        %794 = vmatpush1.msra.mxu0 0.0
        %795 = vmatprep.subr.mxu0 0.0
        %796 = vmatpush1.msra.mxu0 0.0
        %797 = vmatprep.mubr.f32.mxu0 0.0
        %798 = vmatmul.mubr.f32.gmra.mrb[0].mxu0 %v715
        %v799 = vpop.f32.mrb[0].mxu0
        %v800 = vadd.f32 0.0, %v799
        %v801 = vpop.f32.mrb[0].mxu0
        %802 = vdwg.mxu0
        %v804 = vlaneseq
        %v805 = vshrl.u32 %v804, 7
        %v806 = vsub.s32 0, %v805
        %v807 = vrot.slane %v619, %v806
        %v809 = vadd.f32 %v807, %v800
        %v810 = vadd.f32 %v585, %v809
        %v811 = vmul.f32 %v366, %v810
        %v812 = vsub.f32 1.0, %v366
        %v813 = vmul.f32 %v812, %v350
        %v814 = vadd.f32 %v811, %v813
        %815 = vst [vmem:[%s349] sm:$0xff] %v814
        %s816 = sand.u32 %s207, 1
        %s817 = scalar_lea.sflag [#allocation4], %s816
        %s818 = sand.u32 %s207, 1
        %s819 = smul.addr %s818, 8
        %s820 = scalar_lea.vmem [#allocation8], %s819
        // Predicated region
        $region65: #{tpu_custom_call.1} parent=51 // pred_check
          %p821 = pneg %p217
        $region66: #{tpu_custom_call.1} parent=51 // pred_check_branch
          %823 = sbr.rel (%p821) target = $region68
        $region67: #{tpu_custom_call.1} parent=51 // pred_region
          %s825 = ssub.s32 128, 128
          %826 = vsyncadd %s817, %s825
          %s827 = smul.addr %s26, 128
          %s828 = scalar_lea.hbm %s8, %s827
          %s830 = sshll.u32 %s820, 4
          %s831 = int_to_ptr.vmem [resolvable:$true] %s830
          %833 = dma.vmem_to_hbm [thread:$0]  %s831, 128, %s828, %s817
        $region68: #{tpu_custom_call.1} parent=51 // pred_fallthru
          _
      $region52: #{tpu_custom_call.1} parent=5 // pred_fallthru
        _
      %p834 = scmp.le.s32.totalorder 2, %s21
      // Predicated region
      $region69: #{tpu_custom_call.1} parent=5 // pred_check
        %p835 = pneg %p834
      $region70: #{tpu_custom_call.1} parent=5 // pred_check_branch
        %837 = sbr.rel (%p835) target = $region72
      $region71: #{tpu_custom_call.1} parent=5 // pred_region
        %s838 = ssub.s32 %s21, 2
        // Predicated region
        $region73: #{tpu_custom_call.1} parent=71 // pred_check
          %p839 = pneg %p223
        $region74: #{tpu_custom_call.1} parent=71 // pred_check_branch
          %841 = sbr.rel (%p839) target = $region76
        $region75: #{tpu_custom_call.1} parent=71 // pred_region
          %s842 = sand.u32 %s208, 1
          %s843 = scalar_lea.sflag [#allocation4], %s842
          %s844 = sand.u32 %s208, 1
          %s845 = smul.addr %s844, 8
          %s846 = scalar_lea.vmem [#allocation8], %s845
          %847 = dma.done %s843, 128
        $region76: #{tpu_custom_call.1} parent=71 // pred_fallthru
          _
      $region72: #{tpu_custom_call.1} parent=5 // pred_fallthru
        _
    $region6: #{tpu_custom_call.1} parent=1 // loop_footer
      %s25 = sadd.s32 1, %s21
    $region7: #{tpu_custom_call.1} parent=1 // loop_footer_branch
      %20 = sbr.rel target = $region3
    $region8: #{tpu_custom_call.1} parent=1 // loop_exit
      _
    %848 = vsyncpa [#allocation3], 1
    %s849 = scalar_lea.sflag [#allocation3], 1
    %850 = vsyncpa %s849, 1
    %851 = vsyncpa [#allocation6], 1
    %852 = vsyncpa [#allocation4], 1
    %s853 = scalar_lea.sflag [#allocation4], 1
    %854 = vsyncpa %s853, 1

// kernel: tpu_custom_call.1
$region0: #{tpu_custom_call.1}
  #allocation0 [shape = 'u32[]', space=smem, size = 0x4, offset = 0x4, fixed_abs, tag = 'smem constant byte address 0x4 - core index']
  #allocation1 [shape = 'u32[144,128]{1,0:T(1,128)}', space=vmem, size = 0x12000, scoped, tag = 'internal scratch']
  %s0 = inlined_call_operand.hbm [shape: f32[16,128], index: 0, kind: input, shape index: {}]
  %s1 = inlined_call_operand.vmem [shape: f32[1,128], index: 1, kind: input, shape index: {}]
  %s2 = inlined_call_operand.vmem [shape: f32[2,1,128], index: 2, kind: input, shape index: {}]
  %s3 = inlined_call_operand.vmem [shape: f32[2,1,128], index: 3, kind: input, shape index: {}]
  %s4 = inlined_call_operand.hbm [shape: f32[2,128,128], index: 4, kind: input, shape index: {}]
  %s5 = inlined_call_operand.vmem [shape: f32[2,1,128], index: 5, kind: input, shape index: {}]
  %s6 = inlined_call_operand.hbm [shape: f32[2,128,128], index: 6, kind: input, shape index: {}]
  %s7 = inlined_call_operand.vmem [shape: f32[2,1,128], index: 7, kind: input, shape index: {}]
  %s8 = inlined_call_operand.hbm [shape: f32[16,128], index: 8, kind: output, shape index: {}]
  %s9 = sld [smem:[#allocation0]]
  $region77: #{tpu_custom_call.1} parent=0
    _
  %s11 = ssub.s32 1, %s9
  %s12 = scalar_select 0, %s11, %s9
  $region1: #{tpu_custom_call.1} parent=0
    #allocation2 [shape = 'u8[8192]{0}', space=vmem, size = 0x2000, scoped, tag = 'input window, operand 0']
    #allocation3 [shape = 's32[2]{0}', space=sflag, size = 0x8, scoped, tag = 'scoped memory for tpu_custom_call.1']
    #allocation4 [shape = 's32[2]{0}', space=sflag, size = 0x8, scoped, tag = 'scoped memory for tpu_custom_call.1']
    #allocation5 [shape = 'u8[131072]{0}', space=vmem, size = 0x20000, scoped, tag = 'input window, operand 4, single buffered']
    #allocation6 [shape = 's32[1]{0}', space=sflag, size = 0x4, scoped, tag = 'scoped memory for tpu_custom_call.1']
    #allocation7 [shape = 'u8[131072]{0}', space=vmem, size = 0x20000, scoped, tag = 'input window, operand 6, single buffered']
    #allocation8 [shape = 'u8[8192]{0}', space=vmem, size = 0x2000, scoped, tag = 'output window, operand 0']
    %13 = vsyncpa [#allocation3], 0
    %s14 = scalar_lea.sflag [#allocation3], 1
    %15 = vsyncpa %s14, 0
    %16 = vsyncpa [#allocation6], 0
    %17 = vsyncpa [#allocation4], 0
    %s18 = scalar_lea.sflag [#allocation4], 1
    %19 = vsyncpa %s18, 0
    loop: start=0, step=1, limit=4
    $region2: #{tpu_custom_call.1} parent=1 // loop_pre_header
      _
    $region3: #{tpu_custom_call.1} parent=1 // loop_header
      %s21 = sphi 0, %s25
      %p22 = scmp.ge.s32.totalorder %s21, 4
      %s31 = sphi 0, %s33
      %s34 = sphi 0, %s31
      %s35 = sphi 0, %s34
      %s51 = sphi 0, %s35
      %s55 = sphi 0, %s55
      %s57 = sphi 0, %s55
      %s58 = sphi 0, %s57
      %s72 = sphi 0, %s58
      %s76 = sphi 0, %s76
      %s78 = sphi 0, %s76
      %s79 = sphi 0, %s78
      %s93 = sphi 0, %s79
      %s97 = sphi 0, %s97
      %s99 = sphi 0, %s97
      %s100 = sphi 0, %s99
      %s114 = sphi 0, %s100
      %s118 = sphi 0, %s118
      %s120 = sphi 0, %s118
      %s121 = sphi 0, %s120
      %s135 = sphi 0, %s121
      %s139 = sphi 0, %s139
      %s141 = sphi 0, %s139
      %s142 = sphi 0, %s141
      %s156 = sphi 0, %s142
      %s160 = sphi 0, %s160
      %s162 = sphi 0, %s160
      %s163 = sphi 0, %s162
      %s177 = sphi 0, %s163
      %s181 = sphi 0, %s181
      %s183 = sphi 0, %s181
      %s184 = sphi 0, %s183
      %s198 = sphi 0, %s184
      %s204 = sphi 0, %s206
      %s207 = sphi 0, %s204
      %s208 = sphi 0, %s207
      %s224 = sphi 0, %s208
    $region4: #{tpu_custom_call.1} parent=1 // loop_header_branch
      %24 = sbr.rel (%p22) target = $region8
    $region5: #{tpu_custom_call.1} parent=1 // loop_body
      %s26 = ssub.s32 %s21, 1
      %s27 = ssub.s32 %s21, 2
      %s28 = sadd.s32 %s21, 1
      %s29 = ssub.s32 %s21, %s28
      %p30 = scmp.eq.s32.totalorder %s29, 0
      %s32 = sadd.s32 %s31, 1
      %s33 = scalar_select %p30, %s31, %s32
      %p36 = pneg %p30
      %p37 = scmp.eq.s32.totalorder %s21, 1
      %p38 = por %p36, %p37
      %p39 = scmp.ne.s32.totalorder %s31, %s34
      %p40 = scmp.eq.s32.totalorder %s21, 0
      %p41 = por %p39, %p40
      %p42 = scmp.ne.s32.totalorder %s31, %s34
      %p43 = scmp.eq.s32.totalorder %s26, 1
      %p44 = por %p42, %p43
      %p45 = scmp.ne.s32.totalorder %s34, %s35
      %p46 = scmp.eq.s32.totalorder %s26, 0
      %p47 = por %p45, %p46
      %p48 = scmp.ne.s32.totalorder %s34, %s35
      %p49 = scmp.eq.s32.totalorder %s27, 1
      %p50 = por %p48, %p49
      %p52 = scmp.ne.s32.totalorder %s35, %s51
      %p53 = scmp.eq.s32.totalorder %s27, 0
      %p54 = por %p52, %p53
      %s56 = sadd.s32 %s55, 1
      %p59 = scmp.eq.s32.totalorder %s21, 1
      %p60 = scmp.ne.s32.totalorder %s55, %s57
      %p61 = scmp.eq.s32.totalorder %s21, 0
      %p62 = por %p60, %p61
      %p63 = scmp.ne.s32.totalorder %s55, %s57
      %p64 = scmp.eq.s32.totalorder %s26, 1
      %p65 = por %p63, %p64
      %p66 = scmp.ne.s32.totalorder %s57, %s58
      %p67 = scmp.eq.s32.totalorder %s26, 0
      %p68 = por %p66, %p67
      %p69 = scmp.ne.s32.totalorder %s57, %s58
      %p70 = scmp.eq.s32.totalorder %s27, 1
      %p71 = por %p69, %p70
      %p73 = scmp.ne.s32.totalorder %s58, %s72
      %p74 = scmp.eq.s32.totalorder %s27, 0
      %p75 = por %p73, %p74
      %s77 = sadd.s32 %s76, 1
      %p80 = scmp.eq.s32.totalorder %s21, 1
      %p81 = scmp.ne.s32.totalorder %s76, %s78
      %p82 = scmp.eq.s32.totalorder %s21, 0
      %p83 = por %p81, %p82
      %p84 = scmp.ne.s32.totalorder %s76, %s78
      %p85 = scmp.eq.s32.totalorder %s26, 1
      %p86 = por %p84, %p85
      %p87 = scmp.ne.s32.totalorder %s78, %s79
      %p88 = scmp.eq.s32.totalorder %s26, 0
      %p89 = por %p87, %p88
      %p90 = scmp.ne.s32.totalorder %s78, %s79
      %p91 = scmp.eq.s32.totalorder %s27, 1
      %p92 = por %p90, %p91
      %p94 = scmp.ne.s32.totalorder %s79, %s93
      %p95 = scmp.eq.s32.totalorder %s27, 0
      %p96 = por %p94, %p95
      %s98 = sadd.s32 %s97, 1
      %p101 = scmp.eq.s32.totalorder %s21, 1
      %p102 = scmp.ne.s32.totalorder %s97, %s99
      %p103 = scmp.eq.s32.totalorder %s21, 0
      %p104 = por %p102, %p103
      %p105 = scmp.ne.s32.totalorder %s97, %s99
      %p106 = scmp.eq.s32.totalorder %s26, 1
      %p107 = por %p105, %p106
      %p108 = scmp.ne.s32.totalorder %s99, %s100
      %p109 = scmp.eq.s32.totalorder %s26, 0
      %p110 = por %p108, %p109
      %p111 = scmp.ne.s32.totalorder %s99, %s100
      %p112 = scmp.eq.s32.totalorder %s27, 1
      %p113 = por %p111, %p112
      %p115 = scmp.ne.s32.totalorder %s100, %s114
      %p116 = scmp.eq.s32.totalorder %s27, 0
      %p117 = por %p115, %p116
      %s119 = sadd.s32 %s118, 1
      %p122 = scmp.eq.s32.totalorder %s21, 1
      %p123 = scmp.ne.s32.totalorder %s118, %s120
      %p124 = scmp.eq.s32.totalorder %s21, 0
      %p125 = por %p123, %p124
      %p126 = scmp.ne.s32.totalorder %s118, %s120
      %p127 = scmp.eq.s32.totalorder %s26, 1
      %p128 = por %p126, %p127
      %p129 = scmp.ne.s32.totalorder %s120, %s121
      %p130 = scmp.eq.s32.totalorder %s26, 0
      %p131 = por %p129, %p130
      %p132 = scmp.ne.s32.totalorder %s120, %s121
      %p133 = scmp.eq.s32.totalorder %s27, 1
      %p134 = por %p132, %p133
      %p136 = scmp.ne.s32.totalorder %s121, %s135
      %p137 = scmp.eq.s32.totalorder %s27, 0
      %p138 = por %p136, %p137
      %s140 = sadd.s32 %s139, 1
      %p143 = scmp.eq.s32.totalorder %s21, 1
      %p144 = scmp.ne.s32.totalorder %s139, %s141
      %p145 = scmp.eq.s32.totalorder %s21, 0
      %p146 = por %p144, %p145
      %p147 = scmp.ne.s32.totalorder %s139, %s141
      %p148 = scmp.eq.s32.totalorder %s26, 1
      %p149 = por %p147, %p148
      %p150 = scmp.ne.s32.totalorder %s141, %s142
      %p151 = scmp.eq.s32.totalorder %s26, 0
      %p152 = por %p150, %p151
      %p153 = scmp.ne.s32.totalorder %s141, %s142
      %p154 = scmp.eq.s32.totalorder %s27, 1
      %p155 = por %p153, %p154
      %p157 = scmp.ne.s32.totalorder %s142, %s156
      %p158 = scmp.eq.s32.totalorder %s27, 0
      %p159 = por %p157, %p158
      %s161 = sadd.s32 %s160, 1
      %p164 = scmp.eq.s32.totalorder %s21, 1
      %p165 = scmp.ne.s32.totalorder %s160, %s162
      %p166 = scmp.eq.s32.totalorder %s21, 0
      %p167 = por %p165, %p166
      %p168 = scmp.ne.s32.totalorder %s160, %s162
      %p169 = scmp.eq.s32.totalorder %s26, 1
      %p170 = por %p168, %p169
      %p171 = scmp.ne.s32.totalorder %s162, %s163
      %p172 = scmp.eq.s32.totalorder %s26, 0
      %p173 = por %p171, %p172
      %p174 = scmp.ne.s32.totalorder %s162, %s163
      %p175 = scmp.eq.s32.totalorder %s27, 1
      %p176 = por %p174, %p175
      %p178 = scmp.ne.s32.totalorder %s163, %s177
      %p179 = scmp.eq.s32.totalorder %s27, 0
      %p180 = por %p178, %p179
      %s182 = sadd.s32 %s181, 1
      %p185 = scmp.eq.s32.totalorder %s21, 1
      %p186 = scmp.ne.s32.totalorder %s181, %s183
      %p187 = scmp.eq.s32.totalorder %s21, 0
      %p188 = por %p186, %p187
      %p189 = scmp.ne.s32.totalorder %s181, %s183
      %p190 = scmp.eq.s32.totalorder %s26, 1
      %p191 = por %p189, %p190
      %p192 = scmp.ne.s32.totalorder %s183, %s184
      %p193 = scmp.eq.s32.totalorder %s26, 0
      %p194 = por %p192, %p193
      %p195 = scmp.ne.s32.totalorder %s183, %s184
      %p196 = scmp.eq.s32.totalorder %s27, 1
      %p197 = por %p195, %p196
      %p199 = scmp.ne.s32.totalorder %s184, %s198
      %p200 = scmp.eq.s32.totalorder %s27, 0
      %p201 = por %p199, %p200
      %s202 = ssub.s32 %s21, %s28
      %p203 = scmp.eq.s32.totalorder %s202, 0
      %s205 = sadd.s32 %s204, 1
      %s206 = scalar_select %p203, %s204, %s205
      %p209 = pneg %p203
      %p210 = scmp.eq.s32.totalorder %s21, 1
      %p211 = por %p209, %p210
      %p212 = scmp.ne.s32.totalorder %s204, %s207
      %p213 = scmp.eq.s32.totalorder %s21, 0
      %p214 = por %p212, %p213
      %p215 = scmp.ne.s32.totalorder %s204, %s207
      %p216 = scmp.eq.s32.totalorder %s26, 1
      %p217 = por %p215, %p216
      %p218 = scmp.ne.s32.totalorder %s207, %s208
      %p219 = scmp.eq.s32.totalorder %s26, 0
      %p220 = por %p218, %p219
      %p221 = scmp.ne.s32.totalorder %s207, %s208
      %p222 = scmp.eq.s32.totalorder %s27, 1
      %p223 = por %p221, %p222
      %p225 = scmp.ne.s32.totalorder %s208, %s224
      %p226 = scmp.eq.s32.totalorder %s27, 0
      %p227 = por %p225, %p226
      %p228 = scmp.le.s32.totalorder 1, %s21
      %p229 = scmp.lt.s32.totalorder %s21, 3
      %p230 = pnand %p228, %p229
      %p231 = pneg %p230
      // Predicated region
      $region9: #{tpu_custom_call.1} parent=5 // pred_check
        _
      $region10: #{tpu_custom_call.1} parent=5 // pred_check_branch
        %233 = sbr.rel (%p230) target = $region12
      $region11: #{tpu_custom_call.1} parent=5 // pred_region
        %s234 = ssub.s32 %s21, 1
        // Predicated region
        $region13: #{tpu_custom_call.1} parent=11 // pred_check
          %p235 = pneg %p68
        $region14: #{tpu_custom_call.1} parent=11 // pred_check_branch
          %237 = sbr.rel (%p235) target = $region16
        $region15: #{tpu_custom_call.1} parent=11 // pred_region
          _
        $region16: #{tpu_custom_call.1} parent=11 // pred_fallthru
          _
        // Predicated region
        $region17: #{tpu_custom_call.1} parent=11 // pred_check
          %p238 = pneg %p89
        $region18: #{tpu_custom_call.1} parent=11 // pred_check_branch
          %240 = sbr.rel (%p238) target = $region20
        $region19: #{tpu_custom_call.1} parent=11 // pred_region
          _
        $region20: #{tpu_custom_call.1} parent=11 // pred_fallthru
          _
        // Predicated region
        $region21: #{tpu_custom_call.1} parent=11 // pred_check
          %p241 = pneg %p110
        $region22: #{tpu_custom_call.1} parent=11 // pred_check_branch
          %243 = sbr.rel (%p241) target = $region24
        $region23: #{tpu_custom_call.1} parent=11 // pred_region
          _
        $region24: #{tpu_custom_call.1} parent=11 // pred_fallthru
          _
        // Predicated region
        $region25: #{tpu_custom_call.1} parent=11 // pred_check
          %p244 = pneg %p131
        $region26: #{tpu_custom_call.1} parent=11 // pred_check_branch
          %246 = sbr.rel (%p244) target = $region28
        $region27: #{tpu_custom_call.1} parent=11 // pred_region
          %s248 = ssub.s32 4096, 4096
          %249 = vsyncadd [#allocation6], %s248
          %s250 = sshll.u32 [#allocation5], 4
          %s251 = int_to_ptr.vmem [resolvable:$true] %s250
          %256 = dma.hbm_to_vmem [thread:$0]  %s4, 4096, %s251, [#allocation6], 128, 128, 8
        $region28: #{tpu_custom_call.1} parent=11 // pred_fallthru
          _
        // Predicated region
        $region29: #{tpu_custom_call.1} parent=11 // pred_check
          %p257 = pneg %p152
        $region30: #{tpu_custom_call.1} parent=11 // pred_check_branch
          %259 = sbr.rel (%p257) target = $region32
        $region31: #{tpu_custom_call.1} parent=11 // pred_region
          _
        $region32: #{tpu_custom_call.1} parent=11 // pred_fallthru
          _
        // Predicated region
        $region33: #{tpu_custom_call.1} parent=11 // pred_check
          %p260 = pneg %p173
        $region34: #{tpu_custom_call.1} parent=11 // pred_check_branch
          %262 = sbr.rel (%p260) target = $region36
        $region35: #{tpu_custom_call.1} parent=11 // pred_region
          %s264 = ssub.s32 4096, 4096
          %265 = vsyncadd [#allocation6], %s264
          %s266 = sshll.u32 [#allocation7], 4
          %s267 = int_to_ptr.vmem [resolvable:$true] %s266
          %272 = dma.hbm_to_vmem [thread:$0]  %s6, 4096, %s267, [#allocation6], 128, 128, 8
        $region36: #{tpu_custom_call.1} parent=11 // pred_fallthru
          _
        // Predicated region
        $region37: #{tpu_custom_call.1} parent=11 // pred_check
          %p273 = pneg %p194
        $region38: #{tpu_custom_call.1} parent=11 // pred_check_branch
          %275 = sbr.rel (%p273) target = $region40
        $region39: #{tpu_custom_call.1} parent=11 // pred_region
          _
        $region40: #{tpu_custom_call.1} parent=11 // pred_fallthru
          _
      $region12: #{tpu_custom_call.1} parent=5 // pred_fallthru
        _
      %p276 = scmp.lt.s32.totalorder %s21, 2
      // Predicated region
      $region41: #{tpu_custom_call.1} parent=5 // pred_check
        %p277 = pneg %p276
      $region42: #{tpu_custom_call.1} parent=5 // pred_check_branch
        %279 = sbr.rel (%p277) target = $region44
      $region43: #{tpu_custom_call.1} parent=5 // pred_region
        // Predicated region
        $region45: #{tpu_custom_call.1} parent=43 // pred_check
          %p280 = pneg %p41
        $region46: #{tpu_custom_call.1} parent=43 // pred_check_branch
          %282 = sbr.rel (%p280) target = $region48
        $region47: #{tpu_custom_call.1} parent=43 // pred_region
          %s283 = sand.u32 %s31, 1
          %s284 = scalar_lea.sflag [#allocation3], %s283
          %s285 = sand.u32 %s31, 1
          %s286 = smul.addr %s285, 8
          %s287 = scalar_lea.vmem [#allocation2], %s286
          %s289 = ssub.s32 128, 128
          %290 = vsyncadd %s284, %s289
          %s291 = smul.addr %s21, 128
          %s292 = scalar_lea.hbm %s0, %s291
          %s294 = sshll.u32 %s287, 4
          %s295 = int_to_ptr.vmem [resolvable:$true] %s294
          %297 = dma.hbm_to_vmem [thread:$0]  %s292, 128, %s295, %s284
        $region48: #{tpu_custom_call.1} parent=43 // pred_fallthru
          _
      $region44: #{tpu_custom_call.1} parent=5 // pred_fallthru
        _
      %p298 = scmp.le.s32.totalorder 1, %s21
      %p299 = scmp.lt.s32.totalorder %s21, 3
      %p300 = pnand %p298, %p299
      %p301 = pneg %p300
      // Predicated region
      $region49: #{tpu_custom_call.1} parent=5 // pred_check
        _
      $region50: #{tpu_custom_call.1} parent=5 // pred_check_branch
        %303 = sbr.rel (%p300) target = $region52
      $region51: #{tpu_custom_call.1} parent=5 // pred_region
        %s304 = ssub.s32 %s21, 1
        %s305 = sand.u32 %s34, 1
        %s306 = scalar_lea.sflag [#allocation3], %s305
        %s307 = sand.u32 %s34, 1
        %s308 = smul.addr %s307, 8
        %s309 = scalar_lea.vmem [#allocation2], %s308
        // Predicated region
        $region53: #{tpu_custom_call.1} parent=51 // pred_check
          %p310 = pneg %p47
        $region54: #{tpu_custom_call.1} parent=51 // pred_check_branch
          %312 = sbr.rel (%p310) target = $region56
        $region55: #{tpu_custom_call.1} parent=51 // pred_region
          %313 = dma.done %s306, 128
        $region56: #{tpu_custom_call.1} parent=51 // pred_fallthru
          _
        // Predicated region
        $region57: #{tpu_custom_call.1} parent=51 // pred_check
          %p314 = pneg %p131
        $region58: #{tpu_custom_call.1} parent=51 // pred_check_branch
          %316 = sbr.rel (%p314) target = $region60
        $region59: #{tpu_custom_call.1} parent=51 // pred_region
          %317 = dma.done [#allocation6], 4096
        $region60: #{tpu_custom_call.1} parent=51 // pred_fallthru
          _
        // Predicated region
        $region61: #{tpu_custom_call.1} parent=51 // pred_check
          %p318 = pneg %p173
        $region62: #{tpu_custom_call.1} parent=51 // pred_check_branch
          %320 = sbr.rel (%p318) target = $region64
        $region63: #{tpu_custom_call.1} parent=51 // pred_region
          %321 = dma.done [#allocation6], 4096
        $region64: #{tpu_custom_call.1} parent=51 // pred_fallthru
          _
        %s322 = sand.u32 %s34, 1
        %s323 = scalar_lea.sflag [#allocation3], %s322
        %s324 = sand.u32 %s34, 1
        %s325 = smul.addr %s324, 8
        %s326 = scalar_lea.vmem [#allocation2], %s325
        %p327 = pneg %p47
        %p328 = pneg %p44
        %p329 = pneg %p68
        %p330 = pneg %p65
        %p331 = pneg %p89
        %p332 = pneg %p86
        %p333 = pneg %p110
        %p334 = pneg %p107
        %p335 = pneg %p131
        %p336 = pneg %p128
        %p337 = pneg %p152
        %p338 = pneg %p149
        %p339 = pneg %p173
        %p340 = pneg %p170
        %p341 = pneg %p194
        %p342 = pneg %p191
        %p343 = pneg %p220
        %p344 = pneg %p217
        %s345 = sand.u32 %s207, 1
        %s346 = scalar_lea.sflag [#allocation4], %s345
        %s347 = sand.u32 %s207, 1
        %s348 = smul.addr %s347, 8
        %s349 = scalar_lea.vmem [#allocation8], %s348
        %v350 = vld [vmem:[%s309] sm:$0xff]
        %v351 = vld [vmem:[%s1] sm:$0x1]
        %v353 = vlaneseq
        %v354 = vshrl.u32 %v353, 7
        %v355 = vsub.s32 0, %v354
        %v356 = vrot.slane %v351, %v355
        %v358 = vmul.f32 %v350, %v356
        %359 = vadd.xlane.f32.xlu0 %v358
        %v360 = vpop.xlane.xlu0 %359
        %v361 = vxor.u32 %v360, 2147483648
        %v362 = vmul.f32 %v361, 1.442695
        %v363 = vpow.pop %v362
        %v364 = vadd.f32 %v363, 1.0
        %v365 = vrcp.pop %v364
        %v366 = vmul.f32 1.0, %v365
        %v367 = vld [vmem:[%s2] sm:$0x1]
        %v368 = vld [vmem:[%s3] sm:$0x1]
        %369 = vadd.xlane.f32.xlu0 %v350
        %v370 = vpop.xlane.xlu0 %369
        %v371 = vmul.f32 %v370, 0.03125
        %v372 = vmul.f32 %v350, %v350
        %373 = vadd.xlane.f32.xlu0 %v372
        %v374 = vpop.xlane.xlu0 %373
        %v375 = vmul.f32 %v374, 0.03125
        %v376 = vmul.f32 %v371, %v371
        %v377 = vsub.f32 %v375, %v376
        %v378 = vmax.f32 %v377, 0.0
        %v379 = vsub.f32 %v350, %v371
        %v380 = vadd.f32 %v378, 1e-05
        %v381 = vrsqrt.pop %v380
        %v382 = vmul.f32 %v379, %v381
        %v384 = vlaneseq
        %v385 = vshrl.u32 %v384, 7
        %v386 = vsub.s32 0, %v385
        %v387 = vrot.slane %v367, %v386
        %v389 = vmul.f32 %v382, %v387
        %v391 = vlaneseq
        %v392 = vshrl.u32 %v391, 7
        %v393 = vsub.s32 0, %v392
        %v394 = vrot.slane %v368, %v393
        %v396 = vadd.f32 %v389, %v394
        %v397 = vld [vmem:[%s7] sm:$0x1]
        %v398 = vld [vmem:[#allocation5] sm:$0xff]
        %v399 = vld [vmem:[#allocation5 + $0x8] sm:$0xff]
        %v400 = vld [vmem:[#allocation5 + $0x10] sm:$0xff]
        %v401 = vld [vmem:[#allocation5 + $0x18] sm:$0xff]
        %v402 = vld [vmem:[#allocation5 + $0x20] sm:$0xff]
        %v403 = vld [vmem:[#allocation5 + $0x28] sm:$0xff]
        %v404 = vld [vmem:[#allocation5 + $0x30] sm:$0xff]
        %v405 = vld [vmem:[#allocation5 + $0x38] sm:$0xff]
        %v406 = vld [vmem:[#allocation5 + $0x40] sm:$0xff]
        %v407 = vld [vmem:[#allocation5 + $0x48] sm:$0xff]
        %v408 = vld [vmem:[#allocation5 + $0x50] sm:$0xff]
        %v409 = vld [vmem:[#allocation5 + $0x58] sm:$0xff]
        %v410 = vld [vmem:[#allocation5 + $0x60] sm:$0xff]
        %v411 = vld [vmem:[#allocation5 + $0x68] sm:$0xff]
        %v412 = vld [vmem:[#allocation5 + $0x70] sm:$0xff]
        %v413 = vld [vmem:[#allocation5 + $0x78] sm:$0xff]
        %v414 = vld [vmem:[%s5] sm:$0x1]
        %v416 = vlaneseq
        %v417 = vshrl.u32 %v416, 7
        %v418 = vsub.s32 0, %v417
        %v419 = vrot.slane %v414, %v418
        %421 = vmatprep.subr.mxu0 0.0
        %422 = vmatpush1.msra.mxu0 %v398
        %423 = vmatprep.subr.mxu0 0.0
        %424 = vmatpush1.msra.mxu0 %v399
        %425 = vmatprep.subr.mxu0 0.0
        %426 = vmatpush1.msra.mxu0 %v400
        %427 = vmatprep.subr.mxu0 0.0
        %428 = vmatpush1.msra.mxu0 %v401
        %429 = vmatprep.subr.mxu0 0.0
        %430 = vmatpush1.msra.mxu0 %v402
        %431 = vmatprep.subr.mxu0 0.0
        %432 = vmatpush1.msra.mxu0 %v403
        %433 = vmatprep.subr.mxu0 0.0
        %434 = vmatpush1.msra.mxu0 %v404
        %435 = vmatprep.subr.mxu0 0.0
        %436 = vmatpush1.msra.mxu0 %v405
        %437 = vmatprep.subr.mxu0 0.0
        %438 = vmatpush1.msra.mxu0 %v406
        %439 = vmatprep.subr.mxu0 0.0
        %440 = vmatpush1.msra.mxu0 %v407
        %441 = vmatprep.subr.mxu0 0.0
        %442 = vmatpush1.msra.mxu0 %v408
        %443 = vmatprep.subr.mxu0 0.0
        %444 = vmatpush1.msra.mxu0 %v409
        %445 = vmatprep.subr.mxu0 0.0
        %446 = vmatpush1.msra.mxu0 %v410
        %447 = vmatprep.subr.mxu0 0.0
        %448 = vmatpush1.msra.mxu0 %v411
        %449 = vmatprep.subr.mxu0 0.0
        %450 = vmatpush1.msra.mxu0 %v412
        %451 = vmatprep.subr.mxu0 0.0
        %452 = vmatpush1.msra.mxu0 %v413
        %453 = vmatprep.subr.mxu0 0.0
        %454 = vmatpush1.msra.mxu0 0.0
        %455 = vmatprep.subr.mxu0 0.0
        %456 = vmatpush1.msra.mxu0 0.0
        %457 = vmatprep.subr.mxu0 0.0
        %458 = vmatpush1.msra.mxu0 0.0
        %459 = vmatprep.subr.mxu0 0.0
        %460 = vmatpush1.msra.mxu0 0.0
        %461 = vmatprep.subr.mxu0 0.0
        %462 = vmatpush1.msra.mxu0 0.0
        %463 = vmatprep.subr.mxu0 0.0
        %464 = vmatpush1.msra.mxu0 0.0
        %465 = vmatprep.subr.mxu0 0.0
        %466 = vmatpush1.msra.mxu0 0.0
        %467 = vmatprep.subr.mxu0 0.0
        %468 = vmatpush1.msra.mxu0 0.0
        %469 = vmatprep.subr.mxu0 0.0
        %470 = vmatpush1.msra.mxu0 0.0
        %471 = vmatprep.subr.mxu0 0.0
        %472 = vmatpush1.msra.mxu0 0.0
        %473 = vmatprep.subr.mxu0 0.0
        %474 = vmatpush1.msra.mxu0 0.0
        %475 = vmatprep.subr.mxu0 0.0
        %476 = vmatpush1.msra.mxu0 0.0
        %477 = vmatprep.subr.mxu0 0.0
        %478 = vmatpush1.msra.mxu0 0.0
        %479 = vmatprep.subr.mxu0 0.0
        %480 = vmatpush1.msra.mxu0 0.0
        %481 = vmatprep.subr.mxu0 0.0
        %482 = vmatpush1.msra.mxu0 0.0
        %483 = vmatprep.subr.mxu0 0.0
        %484 = vmatpush1.msra.mxu0 0.0
        %485 = vmatprep.mubr.f32.mxu0 0.0
        %486 = vmatmul.mubr.f32.gmra.mrb[0].mxu0 %v396
        %v487 = vpop.f32.mrb[0].mxu0
        %v488 = vadd.f32 %v419, %v487
        %v489 = vpop.f32.mrb[0].mxu0
        %490 = vdwg.mxu0
        %v491 = vmax.f32 %v488, 0.0
        %v492 = vld [vmem:[#allocation7] sm:$0xff]
        %v493 = vld [vmem:[#allocation7 + $0x8] sm:$0xff]
        %v494 = vld [vmem:[#allocation7 + $0x10] sm:$0xff]
        %v495 = vld [vmem:[#allocation7 + $0x18] sm:$0xff]
        %v496 = vld [vmem:[#allocation7 + $0x20] sm:$0xff]
        %v497 = vld [vmem:[#allocation7 + $0x28] sm:$0xff]
        %v498 = vld [vmem:[#allocation7 + $0x30] sm:$0xff]
        %v499 = vld [vmem:[#allocation7 + $0x38] sm:$0xff]
        %v500 = vld [vmem:[#allocation7 + $0x40] sm:$0xff]
        %v501 = vld [vmem:[#allocation7 + $0x48] sm:$0xff]
        %v502 = vld [vmem:[#allocation7 + $0x50] sm:$0xff]
        %v503 = vld [vmem:[#allocation7 + $0x58] sm:$0xff]
        %v504 = vld [vmem:[#allocation7 + $0x60] sm:$0xff]
        %v505 = vld [vmem:[#allocation7 + $0x68] sm:$0xff]
        %v506 = vld [vmem:[#allocation7 + $0x70] sm:$0xff]
        %v507 = vld [vmem:[#allocation7 + $0x78] sm:$0xff]
        %508 = vmatprep.subr.mxu0 0.0
        %509 = vmatpush1.msra.mxu0 %v492
        %510 = vmatprep.subr.mxu0 0.0
        %511 = vmatpush1.msra.mxu0 %v493
        %512 = vmatprep.subr.mxu0 0.0
        %513 = vmatpush1.msra.mxu0 %v494
        %514 = vmatprep.subr.mxu0 0.0
        %515 = vmatpush1.msra.mxu0 %v495
        %516 = vmatprep.subr.mxu0 0.0
        %517 = vmatpush1.msra.mxu0 %v496
        %518 = vmatprep.subr.mxu0 0.0
        %519 = vmatpush1.msra.mxu0 %v497
        %520 = vmatprep.subr.mxu0 0.0
        %521 = vmatpush1.msra.mxu0 %v498
        %522 = vmatprep.subr.mxu0 0.0
        %523 = vmatpush1.msra.mxu0 %v499
        %524 = vmatprep.subr.mxu0 0.0
        %525 = vmatpush1.msra.mxu0 %v500
        %526 = vmatprep.subr.mxu0 0.0
        %527 = vmatpush1.msra.mxu0 %v501
        %528 = vmatprep.subr.mxu0 0.0
        %529 = vmatpush1.msra.mxu0 %v502
        %530 = vmatprep.subr.mxu0 0.0
        %531 = vmatpush1.msra.mxu0 %v503
        %532 = vmatprep.subr.mxu0 0.0
        %533 = vmatpush1.msra.mxu0 %v504
        %534 = vmatprep.subr.mxu0 0.0
        %535 = vmatpush1.msra.mxu0 %v505
        %536 = vmatprep.subr.mxu0 0.0
        %537 = vmatpush1.msra.mxu0 %v506
        %538 = vmatprep.subr.mxu0 0.0
        %539 = vmatpush1.msra.mxu0 %v507
        %540 = vmatprep.subr.mxu0 0.0
        %541 = vmatpush1.msra.mxu0 0.0
        %542 = vmatprep.subr.mxu0 0.0
        %543 = vmatpush1.msra.mxu0 0.0
        %544 = vmatprep.subr.mxu0 0.0
        %545 = vmatpush1.msra.mxu0 0.0
        %546 = vmatprep.subr.mxu0 0.0
        %547 = vmatpush1.msra.mxu0 0.0
        %548 = vmatprep.subr.mxu0 0.0
        %549 = vmatpush1.msra.mxu0 0.0
        %550 = vmatprep.subr.mxu0 0.0
        %551 = vmatpush1.msra.mxu0 0.0
        %552 = vmatprep.subr.mxu0 0.0
        %553 = vmatpush1.msra.mxu0 0.0
        %554 = vmatprep.subr.mxu0 0.0
        %555 = vmatpush1.msra.mxu0 0.0
        %556 = vmatprep.subr.mxu0 0.0
        %557 = vmatpush1.msra.mxu0 0.0
        %558 = vmatprep.subr.mxu0 0.0
        %559 = vmatpush1.msra.mxu0 0.0
        %560 = vmatprep.subr.mxu0 0.0
        %561 = vmatpush1.msra.mxu0 0.0
        %562 = vmatprep.subr.mxu0 0.0
        %563 = vmatpush1.msra.mxu0 0.0
        %564 = vmatprep.subr.mxu0 0.0
        %565 = vmatpush1.msra.mxu0 0.0
        %566 = vmatprep.subr.mxu0 0.0
        %567 = vmatpush1.msra.mxu0 0.0
        %568 = vmatprep.subr.mxu0 0.0
        %569 = vmatpush1.msra.mxu0 0.0
        %570 = vmatprep.subr.mxu0 0.0
        %571 = vmatpush1.msra.mxu0 0.0
        %572 = vmatprep.mubr.f32.mxu0 0.0
        %573 = vmatmul.mubr.f32.gmra.mrb[0].mxu0 %v491
        %v574 = vpop.f32.mrb[0].mxu0
        %v575 = vadd.f32 0.0, %v574
        %v576 = vpop.f32.mrb[0].mxu0
        %577 = vdwg.mxu0
        %v579 = vlaneseq
        %v580 = vshrl.u32 %v579, 7
        %v581 = vsub.s32 0, %v580
        %v582 = vrot.slane %v397, %v581
        %v584 = vadd.f32 %v582, %v575
        %v585 = vadd.f32 %v350, %v584
        %s586 = scalar_lea.vmem %s2, 1
        %v587 = vld [vmem:[%s586] sm:$0x1]
        %s588 = scalar_lea.vmem %s3, 1
        %v589 = vld [vmem:[%s588] sm:$0x1]
        %590 = vadd.xlane.f32.xlu0 %v585
        %v591 = vpop.xlane.xlu0 %590
        %v592 = vmul.f32 %v591, 0.03125
        %v593 = vmul.f32 %v585, %v585
        %594 = vadd.xlane.f32.xlu0 %v593
        %v595 = vpop.xlane.xlu0 %594
        %v596 = vmul.f32 %v595, 0.03125
        %v597 = vmul.f32 %v592, %v592
        %v598 = vsub.f32 %v596, %v597
        %v599 = vmax.f32 %v598, 0.0
        %v600 = vsub.f32 %v585, %v592
        %v601 = vadd.f32 %v599, 1e-05
        %v602 = vrsqrt.pop %v601
        %v603 = vmul.f32 %v600, %v602
        %v605 = vlaneseq
        %v606 = vshrl.u32 %v605, 7
        %v607 = vsub.s32 0, %v606
        %v608 = vrot.slane %v587, %v607
        %v610 = vmul.f32 %v603, %v608
        %v612 = vlaneseq
        %v613 = vshrl.u32 %v612, 7
        %v614 = vsub.s32 0, %v613
        %v615 = vrot.slane %v589, %v614
        %v617 = vadd.f32 %v610, %v615
        %s618 = scalar_lea.vmem %s7, 1
        %v619 = vld [vmem:[%s618] sm:$0x1]
        %s620 = scalar_lea.vmem [#allocation5], 128
        %v621 = vld [vmem:[%s620] sm:$0xff]
        %v622 = vld [vmem:[%s620 + $0x8] sm:$0xff]
        %v623 = vld [vmem:[%s620 + $0x10] sm:$0xff]
        %v624 = vld [vmem:[%s620 + $0x18] sm:$0xff]
        %v625 = vld [vmem:[%s620 + $0x20] sm:$0xff]
        %v626 = vld [vmem:[%s620 + $0x28] sm:$0xff]
        %v627 = vld [vmem:[%s620 + $0x30] sm:$0xff]
        %v628 = vld [vmem:[%s620 + $0x38] sm:$0xff]
        %v629 = vld [vmem:[%s620 + $0x40] sm:$0xff]
        %v630 = vld [vmem:[%s620 + $0x48] sm:$0xff]
        %v631 = vld [vmem:[%s620 + $0x50] sm:$0xff]
        %v632 = vld [vmem:[%s620 + $0x58] sm:$0xff]
        %v633 = vld [vmem:[%s620 + $0x60] sm:$0xff]
        %v634 = vld [vmem:[%s620 + $0x68] sm:$0xff]
        %v635 = vld [vmem:[%s620 + $0x70] sm:$0xff]
        %v636 = vld [vmem:[%s620 + $0x78] sm:$0xff]
        %s637 = scalar_lea.vmem %s5, 1
        %v638 = vld [vmem:[%s637] sm:$0x1]
        %v640 = vlaneseq
        %v641 = vshrl.u32 %v640, 7
        %v642 = vsub.s32 0, %v641
        %v643 = vrot.slane %v638, %v642
        %645 = vmatprep.subr.mxu0 0.0
        %646 = vmatpush1.msra.mxu0 %v621
        %647 = vmatprep.subr.mxu0 0.0
        %648 = vmatpush1.msra.mxu0 %v622
        %649 = vmatprep.subr.mxu0 0.0
        %650 = vmatpush1.msra.mxu0 %v623
        %651 = vmatprep.subr.mxu0 0.0
        %652 = vmatpush1.msra.mxu0 %v624
        %653 = vmatprep.subr.mxu0 0.0
        %654 = vmatpush1.msra.mxu0 %v625
        %655 = vmatprep.subr.mxu0 0.0
        %656 = vmatpush1.msra.mxu0 %v626
        %657 = vmatprep.subr.mxu0 0.0
        %658 = vmatpush1.msra.mxu0 %v627
        %659 = vmatprep.subr.mxu0 0.0
        %660 = vmatpush1.msra.mxu0 %v628
        %661 = vmatprep.subr.mxu0 0.0
        %662 = vmatpush1.msra.mxu0 %v629
        %663 = vmatprep.subr.mxu0 0.0
        %664 = vmatpush1.msra.mxu0 %v630
        %665 = vmatprep.subr.mxu0 0.0
        %666 = vmatpush1.msra.mxu0 %v631
        %667 = vmatprep.subr.mxu0 0.0
        %668 = vmatpush1.msra.mxu0 %v632
        %669 = vmatprep.subr.mxu0 0.0
        %670 = vmatpush1.msra.mxu0 %v633
        %671 = vmatprep.subr.mxu0 0.0
        %672 = vmatpush1.msra.mxu0 %v634
        %673 = vmatprep.subr.mxu0 0.0
        %674 = vmatpush1.msra.mxu0 %v635
        %675 = vmatprep.subr.mxu0 0.0
        %676 = vmatpush1.msra.mxu0 %v636
        %677 = vmatprep.subr.mxu0 0.0
        %678 = vmatpush1.msra.mxu0 0.0
        %679 = vmatprep.subr.mxu0 0.0
        %680 = vmatpush1.msra.mxu0 0.0
        %681 = vmatprep.subr.mxu0 0.0
        %682 = vmatpush1.msra.mxu0 0.0
        %683 = vmatprep.subr.mxu0 0.0
        %684 = vmatpush1.msra.mxu0 0.0
        %685 = vmatprep.subr.mxu0 0.0
        %686 = vmatpush1.msra.mxu0 0.0
        %687 = vmatprep.subr.mxu0 0.0
        %688 = vmatpush1.msra.mxu0 0.0
        %689 = vmatprep.subr.mxu0 0.0
        %690 = vmatpush1.msra.mxu0 0.0
        %691 = vmatprep.subr.mxu0 0.0
        %692 = vmatpush1.msra.mxu0 0.0
        %693 = vmatprep.subr.mxu0 0.0
        %694 = vmatpush1.msra.mxu0 0.0
        %695 = vmatprep.subr.mxu0 0.0
        %696 = vmatpush1.msra.mxu0 0.0
        %697 = vmatprep.subr.mxu0 0.0
        %698 = vmatpush1.msra.mxu0 0.0
        %699 = vmatprep.subr.mxu0 0.0
        %700 = vmatpush1.msra.mxu0 0.0
        %701 = vmatprep.subr.mxu0 0.0
        %702 = vmatpush1.msra.mxu0 0.0
        %703 = vmatprep.subr.mxu0 0.0
        %704 = vmatpush1.msra.mxu0 0.0
        %705 = vmatprep.subr.mxu0 0.0
        %706 = vmatpush1.msra.mxu0 0.0
        %707 = vmatprep.subr.mxu0 0.0
        %708 = vmatpush1.msra.mxu0 0.0
        %709 = vmatprep.mubr.f32.mxu0 0.0
        %710 = vmatmul.mubr.f32.gmra.mrb[0].mxu0 %v617
        %v711 = vpop.f32.mrb[0].mxu0
        %v712 = vadd.f32 %v643, %v711
        %v713 = vpop.f32.mrb[0].mxu0
        %714 = vdwg.mxu0
        %v715 = vmax.f32 %v712, 0.0
        %s716 = scalar_lea.vmem [#allocation7], 128
        %v717 = vld [vmem:[%s716] sm:$0xff]
        %v718 = vld [vmem:[%s716 + $0x8] sm:$0xff]
        %v719 = vld [vmem:[%s716 + $0x10] sm:$0xff]
        %v720 = vld [vmem:[%s716 + $0x18] sm:$0xff]
        %v721 = vld [vmem:[%s716 + $0x20] sm:$0xff]
        %v722 = vld [vmem:[%s716 + $0x28] sm:$0xff]
        %v723 = vld [vmem:[%s716 + $0x30] sm:$0xff]
        %v724 = vld [vmem:[%s716 + $0x38] sm:$0xff]
        %v725 = vld [vmem:[%s716 + $0x40] sm:$0xff]
        %v726 = vld [vmem:[%s716 + $0x48] sm:$0xff]
        %v727 = vld [vmem:[%s716 + $0x50] sm:$0xff]
        %v728 = vld [vmem:[%s716 + $0x58] sm:$0xff]
        %v729 = vld [vmem:[%s716 + $0x60] sm:$0xff]
        %v730 = vld [vmem:[%s716 + $0x68] sm:$0xff]
        %v731 = vld [vmem:[%s716 + $0x70] sm:$0xff]
        %v732 = vld [vmem:[%s716 + $0x78] sm:$0xff]
        %733 = vmatprep.subr.mxu0 0.0
        %734 = vmatpush1.msra.mxu0 %v717
        %735 = vmatprep.subr.mxu0 0.0
        %736 = vmatpush1.msra.mxu0 %v718
        %737 = vmatprep.subr.mxu0 0.0
        %738 = vmatpush1.msra.mxu0 %v719
        %739 = vmatprep.subr.mxu0 0.0
        %740 = vmatpush1.msra.mxu0 %v720
        %741 = vmatprep.subr.mxu0 0.0
        %742 = vmatpush1.msra.mxu0 %v721
        %743 = vmatprep.subr.mxu0 0.0
        %744 = vmatpush1.msra.mxu0 %v722
        %745 = vmatprep.subr.mxu0 0.0
        %746 = vmatpush1.msra.mxu0 %v723
        %747 = vmatprep.subr.mxu0 0.0
        %748 = vmatpush1.msra.mxu0 %v724
        %749 = vmatprep.subr.mxu0 0.0
        %750 = vmatpush1.msra.mxu0 %v725
        %751 = vmatprep.subr.mxu0 0.0
        %752 = vmatpush1.msra.mxu0 %v726
        %753 = vmatprep.subr.mxu0 0.0
        %754 = vmatpush1.msra.mxu0 %v727
        %755 = vmatprep.subr.mxu0 0.0
        %756 = vmatpush1.msra.mxu0 %v728
        %757 = vmatprep.subr.mxu0 0.0
        %758 = vmatpush1.msra.mxu0 %v729
        %759 = vmatprep.subr.mxu0 0.0
        %760 = vmatpush1.msra.mxu0 %v730
        %761 = vmatprep.subr.mxu0 0.0
        %762 = vmatpush1.msra.mxu0 %v731
        %763 = vmatprep.subr.mxu0 0.0
        %764 = vmatpush1.msra.mxu0 %v732
        %765 = vmatprep.subr.mxu0 0.0
        %766 = vmatpush1.msra.mxu0 0.0
        %767 = vmatprep.subr.mxu0 0.0
        %768 = vmatpush1.msra.mxu0 0.0
        %769 = vmatprep.subr.mxu0 0.0
        %770 = vmatpush1.msra.mxu0 0.0
        %771 = vmatprep.subr.mxu0 0.0
        %772 = vmatpush1.msra.mxu0 0.0
        %773 = vmatprep.subr.mxu0 0.0
        %774 = vmatpush1.msra.mxu0 0.0
        %775 = vmatprep.subr.mxu0 0.0
        %776 = vmatpush1.msra.mxu0 0.0
        %777 = vmatprep.subr.mxu0 0.0
        %778 = vmatpush1.msra.mxu0 0.0
        %779 = vmatprep.subr.mxu0 0.0
        %780 = vmatpush1.msra.mxu0 0.0
        %781 = vmatprep.subr.mxu0 0.0
        %782 = vmatpush1.msra.mxu0 0.0
        %783 = vmatprep.subr.mxu0 0.0
        %784 = vmatpush1.msra.mxu0 0.0
        %785 = vmatprep.subr.mxu0 0.0
        %786 = vmatpush1.msra.mxu0 0.0
        %787 = vmatprep.subr.mxu0 0.0
        %788 = vmatpush1.msra.mxu0 0.0
        %789 = vmatprep.subr.mxu0 0.0
        %790 = vmatpush1.msra.mxu0 0.0
        %791 = vmatprep.subr.mxu0 0.0
        %792 = vmatpush1.msra.mxu0 0.0
        %793 = vmatprep.subr.mxu0 0.0
        %794 = vmatpush1.msra.mxu0 0.0
        %795 = vmatprep.subr.mxu0 0.0
        %796 = vmatpush1.msra.mxu0 0.0
        %797 = vmatprep.mubr.f32.mxu0 0.0
        %798 = vmatmul.mubr.f32.gmra.mrb[0].mxu0 %v715
        %v799 = vpop.f32.mrb[0].mxu0
        %v800 = vadd.f32 0.0, %v799
        %v801 = vpop.f32.mrb[0].mxu0
        %802 = vdwg.mxu0
        %v804 = vlaneseq
        %v805 = vshrl.u32 %v804, 7
        %v806 = vsub.s32 0, %v805
        %v807 = vrot.slane %v619, %v806
        %v809 = vadd.f32 %v807, %v800
        %v810 = vadd.f32 %v585, %v809
        %v811 = vmul.f32 %v366, %v810
        %v812 = vsub.f32 1.0, %v366
        %v813 = vmul.f32 %v812, %v350
        %v814 = vadd.f32 %v811, %v813
        %815 = vst [vmem:[%s349] sm:$0xff] %v814
        %s816 = sand.u32 %s207, 1
        %s817 = scalar_lea.sflag [#allocation4], %s816
        %s818 = sand.u32 %s207, 1
        %s819 = smul.addr %s818, 8
        %s820 = scalar_lea.vmem [#allocation8], %s819
        // Predicated region
        $region65: #{tpu_custom_call.1} parent=51 // pred_check
          %p821 = pneg %p217
        $region66: #{tpu_custom_call.1} parent=51 // pred_check_branch
          %823 = sbr.rel (%p821) target = $region68
        $region67: #{tpu_custom_call.1} parent=51 // pred_region
          %s825 = ssub.s32 128, 128
          %826 = vsyncadd %s817, %s825
          %s827 = smul.addr %s26, 128
          %s828 = scalar_lea.hbm %s8, %s827
          %s830 = sshll.u32 %s820, 4
          %s831 = int_to_ptr.vmem [resolvable:$true] %s830
          %833 = dma.vmem_to_hbm [thread:$0]  %s831, 128, %s828, %s817
        $region68: #{tpu_custom_call.1} parent=51 // pred_fallthru
          _
      $region52: #{tpu_custom_call.1} parent=5 // pred_fallthru
        _
      %p834 = scmp.le.s32.totalorder 2, %s21
      // Predicated region
      $region69: #{tpu_custom_call.1} parent=5 // pred_check
        %p835 = pneg %p834
      $region70: #{tpu_custom_call.1} parent=5 // pred_check_branch
        %837 = sbr.rel (%p835) target = $region72
      $region71: #{tpu_custom_call.1} parent=5 // pred_region
        %s838 = ssub.s32 %s21, 2
        // Predicated region
        $region73: #{tpu_custom_call.1} parent=71 // pred_check
          %p839 = pneg %p223
        $region74: #{tpu_custom_call.1} parent=71 // pred_check_branch
          %841 = sbr.rel (%p839) target = $region76
        $region75: #{tpu_custom_call.1} parent=71 // pred_region
          %s842 = sand.u32 %s208, 1
          %s843 = scalar_lea.sflag [#allocation4], %s842
          %s844 = sand.u32 %s208, 1
          %s845 = smul.addr %s844, 8
          %s846 = scalar_lea.vmem [#allocation8], %s845
          %847 = dma.done %s843, 128
        $region76: #{tpu_custom_call.1} parent=71 // pred_fallthru
          _
      $region72: #{tpu_custom_call.1} parent=5 // pred_fallthru
        _
    $region6: #{tpu_custom_call.1} parent=1 // loop_footer
      %s25 = sadd.s32 1, %s21
    $region7: #{tpu_custom_call.1} parent=1 // loop_footer_branch
      %20 = sbr.rel target = $region3
    $region8: #{tpu_custom_call.1} parent=1 // loop_exit
      _
    %848 = vsyncpa [#allocation3], 1
    %s849 = scalar_lea.sflag [#allocation3], 1
    %850 = vsyncpa %s849, 1
    %851 = vsyncpa [#allocation6], 1
    %852 = vsyncpa [#allocation4], 1
    %s853 = scalar_lea.sflag [#allocation4], 1
    %854 = vsyncpa %s853, 1

</llo_original>
